<compile_context>
chip_gen: v7x
topology: tpu7x:2x2x1
jax: 0.10.0
libtpu: 0.0.40
codegen_flags: <defaults>
</compile_context>

<pallas_src>
import functools

import jax
import jax.numpy as jnp
from jax import lax
from jax.experimental import pallas as pl
from jax.experimental.pallas import tpu as pltpu


def _round_up(x, m):
    return ((x + m - 1) // m) * m


def _spatial_attn_kernel(x_ref, wband_ref, bias_ref, o_ref,
                         pad_ref, col_ref, sum_ref, max_ref, *, c_total):
    # x_ref     : (1, C_blk, H, W)        one channel-chunk of one image (NCHW)
    # wband_ref : (14*Wp_pad, W) bf16     banded, lane-padded conv weights
    # bias_ref  : (1, 1) f32              conv bias
    # o_ref     : (1, H, W)               sigmoid attention map (written on last chunk)
    # pad_ref   : (2, H+6, Wp_pad) bf16   zero-padded [avg; max] planes (scratch)
    # col_ref   : (H, 14*Wp_pad) bf16     im2col tile (scratch)
    # sum_ref   : (H, W) f32              running channel sum (scratch)
    # max_ref   : (H, W) f32              running channel max (scratch)
    _, c_blk, H, W = x_ref.shape
    Wp_pad = pad_ref.shape[-1]
    c_idx = pl.program_id(1)
    num_c = pl.num_programs(1)

    @pl.when(c_idx == 0)
    def _():
        sum_ref[...] = jnp.zeros_like(sum_ref)
        max_ref[...] = jnp.full_like(max_ref, -jnp.inf)

    # ---- single-pass fused sum + max over this chunk's channels (VPU) -------
    def body(c, carry):
        s, m = carry
        xc = x_ref[0, c, :, :].astype(jnp.float32)          # (H, W)
        return s + xc, jnp.maximum(m, xc)

    s, m = lax.fori_loop(0, c_blk, body, (sum_ref[...], max_ref[...]),
                         unroll=min(c_blk, 8))
    sum_ref[...] = s
    max_ref[...] = m

    # ---- last chunk only: pad -> im2col -> one MXU matmul -> sigmoid --------
    @pl.when(c_idx == num_c - 1)
    def _():
        avg = s * (1.0 / c_total)                            # (H, W) f32

        # Refresh the 3-wide halo border + lane-pad tail of the bf16 padded
        # scratch; the interior is fully overwritten below.  The tail must be
        # zero (not garbage) even though its weight rows are zero, to avoid
        # NaN * 0 from uninitialized VMEM.
        pad_ref[:, 0:3, :] = jnp.zeros((2, 3, Wp_pad), jnp.bfloat16)
        pad_ref[:, H + 3:H + 6, :] = jnp.zeros((2, 3, Wp_pad), jnp.bfloat16)
        pad_ref[:, 3:H + 3, 0:3] = jnp.zeros((2, H, 3), jnp.bfloat16)
        pad_ref[:, 3:H + 3, W + 3:Wp_pad] = jnp.zeros(
            (2, H, Wp_pad - (W + 3)), jnp.bfloat16)
        pad_ref[0, 3:H + 3, 3:W + 3] = avg.astype(jnp.bfloat16)   # cast once
        pad_ref[1, 3:H + 3, 3:W + 3] = m.astype(jnp.bfloat16)     # cast once

        # im2col: 14 shifted padded rows; each slab offset is a multiple of 128
        # (lane-aligned -> unmasked stores), no per-copy dtype cast.
        for c in range(2):
            for ky in range(7):
                off = (c * 7 + ky) * Wp_pad
                col_ref[:, off:off + Wp_pad] = pad_ref[c, ky:ky + H, :]

        # Fused 7x7 / 2-channel conv as ONE MXU matmul: (H, K) @ (K, W).
        y = jnp.dot(col_ref[...], wband_ref[...],
                    preferred_element_type=jnp.float32)
        y = y + bias_ref[...]                                # (1,1) broadcast

        # sigmoid: exp on EUP + approximate reciprocal on EUP (no VALU divide)
        attn = pl.reciprocal(1.0 + jnp.exp(-y), approx=True)
        o_ref[0] = attn.astype(o_ref.dtype)


def build_banded_weights(w7, W, Wp_pad):
    """w7: (1, 2, 7, 7) OIHW conv weight -> banded matrix (14*Wp_pad, W) bf16.

    band[(c, ky, j), w] = w7[0, c, ky, j - w] if 0 <= j - w < 7 else 0, so that
      out[h, w] = sum_{c, ky, j} pad[c, h + ky, j] * band[(c, ky, j), w]
    equals the 7x7 / pad-3 convolution.  Rows with j >= W+6 (the lane-pad tail
    of each slab) are all zero.  Build ONCE per weight value, not per forward.
    """
    j = jnp.arange(Wp_pad)[:, None]                      # (Wp_pad, 1)
    wcol = jnp.arange(W)[None, :]                        # (1, W)
    d = j - wcol                                         # (Wp_pad, W)
    valid = (d >= 0) & (d < 7)                           # j >= W+6 -> invalid
    dcl = jnp.clip(d, 0, 6)
    taps = w7[0]                                         # (2, 7, 7)
    band = jnp.where(valid[None, None], taps[:, :, dcl], 0.0)   # (2,7,Wp_pad,W)
    return band.reshape(2 * 7 * Wp_pad, W).astype(jnp.bfloat16)


def _choose_c_block(C, H, W, itemsize, budget_bytes=4 << 20):
    """Largest divisor of C whose (C_blk, H, W) x-block stays under the per-
    buffer VMEM budget (the pipeline double-buffers the block)."""
    per_ch = max(1, H * W * itemsize)
    max_blk = max(1, budget_bytes // per_ch)
    blk = 1
    for d in range(1, C + 1):
        if C % d == 0 and d <= max_blk:
            blk = d
    return blk


def spatial_attention_pallas(x_nchw, wband, bias):
    """x_nchw: (N, C, H, W); wband: (14*Wp_pad, W) bf16 from
    build_banded_weights; bias: (1,).  Returns (N, 1, H, W) attention map."""
    N, C, H, W = x_nchw.shape
    Wp_pad = wband.shape[0] // 14
    K = 14 * Wp_pad

    c_blk = _choose_c_block(C, H, W, x_nchw.dtype.itemsize)
    num_c = C // c_blk

    b2d = bias.reshape(1, 1).astype(jnp.float32)
    kernel = functools.partial(_spatial_attn_kernel, c_total=C)

    out_nhw = pl.pallas_call(
        kernel,
        out_shape=jax.ShapeDtypeStruct((N, H, W), x_nchw.dtype),
        grid_spec=pltpu.PrefetchScalarGridSpec(
            num_scalar_prefetch=0,
            grid=(N, num_c),
            in_specs=[
                pl.BlockSpec((1, c_blk, H, W), lambda n, c: (n, c, 0, 0)),
                pl.BlockSpec((K, W), lambda n, c: (0, 0)),
                pl.BlockSpec((1, 1), lambda n, c: (0, 0)),
            ],
            out_specs=pl.BlockSpec((1, H, W), lambda n, c: (n, 0, 0)),
            scratch_shapes=[
                pltpu.VMEM((2, H + 6, Wp_pad), jnp.bfloat16),   # padded planes
                pltpu.VMEM((H, K), jnp.bfloat16),               # im2col tile
                pltpu.VMEM((H, W), jnp.float32),                # running sum
                pltpu.VMEM((H, W), jnp.float32),                # running max
            ],
        ),
        compiler_params=pltpu.CompilerParams(
            dimension_semantics=("parallel", "arbitrary"),
            vmem_limit_bytes=48 * 1024 * 1024,
        ),
    )(x_nchw, wband, b2d)

    return out_nhw[:, None, :, :]                        # (N, 1, H, W)


# ---------------------------- reference (pure JAX) ---------------------------
def spatial_attention_ref(x, w7, bias):
    avg = jnp.mean(x, axis=1, keepdims=True)
    mx = jnp.max(x, axis=1, keepdims=True)
    cat = jnp.concatenate([avg, mx], axis=1)             # (N, 2, H, W)
    y = lax.conv_general_dilated(
        cat, w7, window_strides=(1, 1), padding=[(3, 3), (3, 3)],
        dimension_numbers=("NCHW", "OIHW", "NCHW"))
    y = y + bias[None, :, None, None]
    return jax.nn.sigmoid(y)


if __name__ == "__main__":
    N, C, H, W = 2, 4, 16, 16

    key = jax.random.PRNGKey(0)
    k0, k1, k2 = jax.random.split(key, 3)

    x = jax.random.normal(k0, (N, C, H, W), jnp.float32)
    w7 = jax.random.normal(k1, (1, 2, 7, 7), jnp.float32) * 0.3
    bias = 0.1 * jax.random.normal(k2, (1,), jnp.float32)

    # Banded weights are precomputed once per weight value (hoisted out of the
    # per-forward path) and reused for every call.
    Wp_pad = _round_up(W + 6, 128)
    wband = jax.block_until_ready(build_banded_weights(w7, W, Wp_pad))

    out = spatial_attention_pallas(x, wband, bias)
    out = jax.block_until_ready(out)

    ref = spatial_attention_ref(x, w7, bias)
    assert out.shape == (N, 1, H, W)
    # Tolerance accounts for bf16 MXU inputs + EUP approximate reciprocal
    # (f32 accumulation kept); output is a sigmoid map in (0, 1).
    assert jnp.allclose(out, ref, atol=2e-2, rtol=2e-2), (
        f"max abs err = {jnp.max(jnp.abs(out - ref))}")

    print("KERNEL_OK")
</pallas_src>

<mosaic_0001>
module attributes {stable_mosaic.version = 11 : i64} {
  func.func @_spatial_attn_kernel(%arg0: i32, %arg1: i32, %arg2: memref<1x4x16x16xf32, #tpu.memory_space<vmem>>, %arg3: memref<1792x16xbf16, #tpu.memory_space<vmem>>, %arg4: memref<1x1xf32, #tpu.memory_space<vmem>>, %arg5: memref<1x16x16xf32, #tpu.memory_space<vmem>>, %arg6: memref<2x22x128xbf16, #tpu.memory_space<vmem>>, %arg7: memref<16x1792xbf16, #tpu.memory_space<vmem>>, %arg8: memref<16x16xf32, #tpu.memory_space<vmem>>, %arg9: memref<16x16xf32, #tpu.memory_space<vmem>>) attributes {dimension_semantics = [#tpu.dimension_semantics<parallel>, #tpu.dimension_semantics<arbitrary>], iteration_bounds = array<i64: 2, 1>, scalar_prefetch = 0 : i64, scratch_operands = 4 : i64, tpu.core_type = #tpu.core_type<tc>, window_params = [{transform_indices = @transform_0, window_bounds = array<i64: 1, 4, 16, 16>}, {pipeline_mode = #tpu.pipeline_mode<synchronous>, transform_indices = @transform_1, window_bounds = array<i64: 1792, 16>}, {pipeline_mode = #tpu.pipeline_mode<synchronous>, transform_indices = @transform_2, window_bounds = array<i64: 1, 1>}, {transform_indices = @transform_3, window_bounds = array<i64: 1, 16, 16>}]} {
    %c0_i32 = arith.constant 0 : i32
    %0 = arith.cmpi eq, %arg1, %c0_i32 : i32
    %1 = arith.extui %0 : i1 to i32
    %c0_i32_0 = arith.constant 0 : i32
    %2 = arith.cmpi ne, %1, %c0_i32_0 : i32
    scf.if %2 {
      %cst = arith.constant 0.000000e+00 : f32
      %30 = vector.broadcast %cst : f32 to vector<16x16xf32>
      %c0_23 = arith.constant 0 : index
      %c0_24 = arith.constant 0 : index
      %31 = vector.load %arg8[%c0_23, %c0_24] : memref<16x16xf32, #tpu.memory_space<vmem>>, vector<16x16xf32>
      tpu.vector_store %arg8[%c0_23, %c0_24], %30 {strides = array<i32>} : memref<16x16xf32, #tpu.memory_space<vmem>>, vector<16x16xf32>,
      %cst_25 = arith.constant 0xFF800000 : f32
      %32 = vector.broadcast %cst_25 : f32 to vector<16x16xf32>
      %c0_26 = arith.constant 0 : index
      %c0_27 = arith.constant 0 : index
      %33 = vector.load %arg9[%c0_26, %c0_27] : memref<16x16xf32, #tpu.memory_space<vmem>>, vector<16x16xf32>
      tpu.vector_store %arg9[%c0_26, %c0_27], %32 {strides = array<i32>} : memref<16x16xf32, #tpu.memory_space<vmem>>, vector<16x16xf32>,
    } else {
    }
    %c0 = arith.constant 0 : index
    %c0_1 = arith.constant 0 : index
    %3 = vector.load %arg8[%c0, %c0_1] : memref<16x16xf32, #tpu.memory_space<vmem>>, vector<16x16xf32>
    %c0_2 = arith.constant 0 : index
    %c0_3 = arith.constant 0 : index
    %4 = vector.load %arg9[%c0_2, %c0_3] : memref<16x16xf32, #tpu.memory_space<vmem>>, vector<16x16xf32>
    %c0_i32_4 = arith.constant 0 : i32
    %c0_5 = arith.constant 0 : index
    %5 = arith.index_cast %c0_i32_4 : i32 to index
    %c0_6 = arith.constant 0 : index
    %c0_7 = arith.constant 0 : index
    %6 = vector.load %arg2[%c0_5, %5, %c0_6, %c0_7] : memref<1x4x16x16xf32, #tpu.memory_space<vmem>>, vector<1x1x16x16xf32>
    %7 = vector.shape_cast %6 : vector<1x1x16x16xf32> to vector<16x16xf32>
    %8 = arith.addf %3, %7 : vector<16x16xf32>
    %9 = arith.maximumf %4, %7 : vector<16x16xf32>
    %c1_i32 = arith.constant 1 : i32
    %c0_8 = arith.constant 0 : index
    %10 = arith.index_cast %c1_i32 : i32 to index
    %c0_9 = arith.constant 0 : index
    %c0_10 = arith.constant 0 : index
    %11 = vector.load %arg2[%c0_8, %10, %c0_9, %c0_10] : memref<1x4x16x16xf32, #tpu.memory_space<vmem>>, vector<1x1x16x16xf32>
    %12 = vector.shape_cast %11 : vector<1x1x16x16xf32> to vector<16x16xf32>
    %13 = arith.addf %8, %12 : vector<16x16xf32>
    %14 = arith.maximumf %9, %12 : vector<16x16xf32>
    %c2_i32 = arith.constant 2 : i32
    %c0_11 = arith.constant 0 : index
    %15 = arith.index_cast %c2_i32 : i32 to index
    %c0_12 = arith.constant 0 : index
    %c0_13 = arith.constant 0 : index
    %16 = vector.load %arg2[%c0_11, %15, %c0_12, %c0_13] : memref<1x4x16x16xf32, #tpu.memory_space<vmem>>, vector<1x1x16x16xf32>
    %17 = vector.shape_cast %16 : vector<1x1x16x16xf32> to vector<16x16xf32>
    %18 = arith.addf %13, %17 : vector<16x16xf32>
    %19 = arith.maximumf %14, %17 : vector<16x16xf32>
    %c3_i32 = arith.constant 3 : i32
    %c0_14 = arith.constant 0 : index
    %20 = arith.index_cast %c3_i32 : i32 to index
    %c0_15 = arith.constant 0 : index
    %c0_16 = arith.constant 0 : index
    %21 = vector.load %arg2[%c0_14, %20, %c0_15, %c0_16] : memref<1x4x16x16xf32, #tpu.memory_space<vmem>>, vector<1x1x16x16xf32>
    %22 = vector.shape_cast %21 : vector<1x1x16x16xf32> to vector<16x16xf32>
    %23 = arith.addf %18, %22 : vector<16x16xf32>
    %24 = arith.maximumf %19, %22 : vector<16x16xf32>
    %c4_i32 = arith.constant 4 : i32
    %c0_17 = arith.constant 0 : index
    %c0_18 = arith.constant 0 : index
    %25 = vector.load %arg8[%c0_17, %c0_18] : memref<16x16xf32, #tpu.memory_space<vmem>>, vector<16x16xf32>
    tpu.vector_store %arg8[%c0_17, %c0_18], %23 {strides = array<i32>} : memref<16x16xf32, #tpu.memory_space<vmem>>, vector<16x16xf32>,
    %c0_19 = arith.constant 0 : index
    %c0_20 = arith.constant 0 : index
    %26 = vector.load %arg9[%c0_19, %c0_20] : memref<16x16xf32, #tpu.memory_space<vmem>>, vector<16x16xf32>
    tpu.vector_store %arg9[%c0_19, %c0_20], %24 {strides = array<i32>} : memref<16x16xf32, #tpu.memory_space<vmem>>, vector<16x16xf32>,
    %c0_i32_21 = arith.constant 0 : i32
    %27 = arith.cmpi eq, %arg1, %c0_i32_21 : i32
    %28 = arith.extui %27 : i1 to i32
    %c0_i32_22 = arith.constant 0 : i32
    %29 = arith.cmpi ne, %28, %c0_i32_22 : i32
    scf.if %29 {
      %cst = arith.constant 2.500000e-01 : f32
      %30 = vector.broadcast %cst : f32 to vector<16x16xf32>
      %31 = arith.mulf %23, %30 : vector<16x16xf32>
      %cst_23 = arith.constant 0.000000e+00 : bf16
      %32 = vector.broadcast %cst_23 : bf16 to vector<2x3x128xbf16>
      %c0_24 = arith.constant 0 : index
      %c0_25 = arith.constant 0 : index
      %c0_26 = arith.constant 0 : index
      %33 = vector.load %arg6[%c0_24, %c0_25, %c0_26] : memref<2x22x128xbf16, #tpu.memory_space<vmem>>, vector<2x3x128xbf16>
      tpu.vector_store %arg6[%c0_24, %c0_25, %c0_26], %32 {strides = array<i32>} : memref<2x22x128xbf16, #tpu.memory_space<vmem>>, vector<2x3x128xbf16>,
      %cst_27 = arith.constant 0.000000e+00 : bf16
      %34 = vector.broadcast %cst_27 : bf16 to vector<2x3x128xbf16>
      %c0_28 = arith.constant 0 : index
      %c19 = arith.constant 19 : index
      %c0_29 = arith.constant 0 : index
      %35 = vector.load %arg6[%c0_28, %c19, %c0_29] : memref<2x22x128xbf16, #tpu.memory_space<vmem>>, vector<2x3x128xbf16>
      tpu.vector_store %arg6[%c0_28, %c19, %c0_29], %34 {strides = array<i32>} : memref<2x22x128xbf16, #tpu.memory_space<vmem>>, vector<2x3x128xbf16>,
      %cst_30 = arith.constant 0.000000e+00 : bf16
      %36 = vector.broadcast %cst_30 : bf16 to vector<2x16x3xbf16>
      %c0_31 = arith.constant 0 : index
      %c3 = arith.constant 3 : index
      %c0_32 = arith.constant 0 : index
      %37 = vector.load %arg6[%c0_31, %c3, %c0_32] : memref<2x22x128xbf16, #tpu.memory_space<vmem>>, vector<2x16x3xbf16>
      tpu.vector_store %arg6[%c0_31, %c3, %c0_32], %36 {strides = array<i32>} : memref<2x22x128xbf16, #tpu.memory_space<vmem>>, vector<2x16x3xbf16>,
      %cst_33 = arith.constant 0.000000e+00 : bf16
      %38 = vector.broadcast %cst_33 : bf16 to vector<2x16x109xbf16>
      %c0_34 = arith.constant 0 : index
      %c3_35 = arith.constant 3 : index
      %c19_36 = arith.constant 19 : index
      %39 = vector.load %arg6[%c0_34, %c3_35, %c19_36] : memref<2x22x128xbf16, #tpu.memory_space<vmem>>, vector<2x16x109xbf16>
      tpu.vector_store %arg6[%c0_34, %c3_35, %c19_36], %38 {strides = array<i32>} : memref<2x22x128xbf16, #tpu.memory_space<vmem>>, vector<2x16x109xbf16>,
      %40 = arith.truncf %31 : vector<16x16xf32> to vector<16x16xbf16>
      %c0_37 = arith.constant 0 : index
      %c3_38 = arith.constant 3 : index
      %c3_39 = arith.constant 3 : index
      %41 = vector.load %arg6[%c0_37, %c3_38, %c3_39] : memref<2x22x128xbf16, #tpu.memory_space<vmem>>, vector<1x16x16xbf16>
      %42 = vector.shape_cast %41 : vector<1x16x16xbf16> to vector<16x16xbf16>
      %43 = vector.shape_cast %40 : vector<16x16xbf16> to vector<1x16x16xbf16>
      tpu.vector_store %arg6[%c0_37, %c3_38, %c3_39], %43 {strides = array<i32>} : memref<2x22x128xbf16, #tpu.memory_space<vmem>>, vector<1x16x16xbf16>,
      %44 = arith.truncf %24 : vector<16x16xf32> to vector<16x16xbf16>
      %c1 = arith.constant 1 : index
      %c3_40 = arith.constant 3 : index
      %c3_41 = arith.constant 3 : index
      %45 = vector.load %arg6[%c1, %c3_40, %c3_41] : memref<2x22x128xbf16, #tpu.memory_space<vmem>>, vector<1x16x16xbf16>
      %46 = vector.shape_cast %45 : vector<1x16x16xbf16> to vector<16x16xbf16>
      %47 = vector.shape_cast %44 : vector<16x16xbf16> to vector<1x16x16xbf16>
      tpu.vector_store %arg6[%c1, %c3_40, %c3_41], %47 {strides = array<i32>} : memref<2x22x128xbf16, #tpu.memory_space<vmem>>, vector<1x16x16xbf16>,
      %c0_42 = arith.constant 0 : index
      %c0_43 = arith.constant 0 : index
      %c0_44 = arith.constant 0 : index
      %48 = vector.load %arg6[%c0_42, %c0_43, %c0_44] : memref<2x22x128xbf16, #tpu.memory_space<vmem>>, vector<1x16x128xbf16>
      %49 = vector.shape_cast %48 : vector<1x16x128xbf16> to vector<16x128xbf16>
      %c0_45 = arith.constant 0 : index
      %c0_46 = arith.constant 0 : index
      %50 = vector.load %arg7[%c0_45, %c0_46] : memref<16x1792xbf16, #tpu.memory_space<vmem>>, vector<16x128xbf16>
      tpu.vector_store %arg7[%c0_45, %c0_46], %49 {strides = array<i32>} : memref<16x1792xbf16, #tpu.memory_space<vmem>>, vector<16x128xbf16>,
      %c0_47 = arith.constant 0 : index
      %c1_48 = arith.constant 1 : index
      %c0_49 = arith.constant 0 : index
      %51 = vector.load %arg6[%c0_47, %c1_48, %c0_49] : memref<2x22x128xbf16, #tpu.memory_space<vmem>>, vector<1x16x128xbf16>
      %52 = vector.shape_cast %51 : vector<1x16x128xbf16> to vector<16x128xbf16>
      %c0_50 = arith.constant 0 : index
      %c128 = arith.constant 128 : index
      %53 = vector.load %arg7[%c0_50, %c128] : memref<16x1792xbf16, #tpu.memory_space<vmem>>, vector<16x128xbf16>
      tpu.vector_store %arg7[%c0_50, %c128], %52 {strides = array<i32>} : memref<16x1792xbf16, #tpu.memory_space<vmem>>, vector<16x128xbf16>,
      %c0_51 = arith.constant 0 : index
      %c2 = arith.constant 2 : index
      %c0_52 = arith.constant 0 : index
      %54 = vector.load %arg6[%c0_51, %c2, %c0_52] : memref<2x22x128xbf16, #tpu.memory_space<vmem>>, vector<1x16x128xbf16>
      %55 = vector.shape_cast %54 : vector<1x16x128xbf16> to vector<16x128xbf16>
      %c0_53 = arith.constant 0 : index
      %c256 = arith.constant 256 : index
      %56 = vector.load %arg7[%c0_53, %c256] : memref<16x1792xbf16, #tpu.memory_space<vmem>>, vector<16x128xbf16>
      tpu.vector_store %arg7[%c0_53, %c256], %55 {strides = array<i32>} : memref<16x1792xbf16, #tpu.memory_space<vmem>>, vector<16x128xbf16>,
      %c0_54 = arith.constant 0 : index
      %c3_55 = arith.constant 3 : index
      %c0_56 = arith.constant 0 : index
      %57 = vector.load %arg6[%c0_54, %c3_55, %c0_56] : memref<2x22x128xbf16, #tpu.memory_space<vmem>>, vector<1x16x128xbf16>
      %58 = vector.shape_cast %57 : vector<1x16x128xbf16> to vector<16x128xbf16>
      %c0_57 = arith.constant 0 : index
      %c384 = arith.constant 384 : index
      %59 = vector.load %arg7[%c0_57, %c384] : memref<16x1792xbf16, #tpu.memory_space<vmem>>, vector<16x128xbf16>
      tpu.vector_store %arg7[%c0_57, %c384], %58 {strides = array<i32>} : memref<16x1792xbf16, #tpu.memory_space<vmem>>, vector<16x128xbf16>,
      %c0_58 = arith.constant 0 : index
      %c4 = arith.constant 4 : index
      %c0_59 = arith.constant 0 : index
      %60 = vector.load %arg6[%c0_58, %c4, %c0_59] : memref<2x22x128xbf16, #tpu.memory_space<vmem>>, vector<1x16x128xbf16>
      %61 = vector.shape_cast %60 : vector<1x16x128xbf16> to vector<16x128xbf16>
      %c0_60 = arith.constant 0 : index
      %c512 = arith.constant 512 : index
      %62 = vector.load %arg7[%c0_60, %c512] : memref<16x1792xbf16, #tpu.memory_space<vmem>>, vector<16x128xbf16>
      tpu.vector_store %arg7[%c0_60, %c512], %61 {strides = array<i32>} : memref<16x1792xbf16, #tpu.memory_space<vmem>>, vector<16x128xbf16>,
      %c0_61 = arith.constant 0 : index
      %c5 = arith.constant 5 : index
      %c0_62 = arith.constant 0 : index
      %63 = vector.load %arg6[%c0_61, %c5, %c0_62] : memref<2x22x128xbf16, #tpu.memory_space<vmem>>, vector<1x16x128xbf16>
      %64 = vector.shape_cast %63 : vector<1x16x128xbf16> to vector<16x128xbf16>
      %c0_63 = arith.constant 0 : index
      %c640 = arith.constant 640 : index
      %65 = vector.load %arg7[%c0_63, %c640] : memref<16x1792xbf16, #tpu.memory_space<vmem>>, vector<16x128xbf16>
      tpu.vector_store %arg7[%c0_63, %c640], %64 {strides = array<i32>} : memref<16x1792xbf16, #tpu.memory_space<vmem>>, vector<16x128xbf16>,
      %c0_64 = arith.constant 0 : index
      %c6 = arith.constant 6 : index
      %c0_65 = arith.constant 0 : index
      %66 = vector.load %arg6[%c0_64, %c6, %c0_65] : memref<2x22x128xbf16, #tpu.memory_space<vmem>>, vector<1x16x128xbf16>
      %67 = vector.shape_cast %66 : vector<1x16x128xbf16> to vector<16x128xbf16>
      %c0_66 = arith.constant 0 : index
      %c768 = arith.constant 768 : index
      %68 = vector.load %arg7[%c0_66, %c768] : memref<16x1792xbf16, #tpu.memory_space<vmem>>, vector<16x128xbf16>
      tpu.vector_store %arg7[%c0_66, %c768], %67 {strides = array<i32>} : memref<16x1792xbf16, #tpu.memory_space<vmem>>, vector<16x128xbf16>,
      %c1_67 = arith.constant 1 : index
      %c0_68 = arith.constant 0 : index
      %c0_69 = arith.constant 0 : index
      %69 = vector.load %arg6[%c1_67, %c0_68, %c0_69] : memref<2x22x128xbf16, #tpu.memory_space<vmem>>, vector<1x16x128xbf16>
      %70 = vector.shape_cast %69 : vector<1x16x128xbf16> to vector<16x128xbf16>
      %c0_70 = arith.constant 0 : index
      %c896 = arith.constant 896 : index
      %71 = vector.load %arg7[%c0_70, %c896] : memref<16x1792xbf16, #tpu.memory_space<vmem>>, vector<16x128xbf16>
      tpu.vector_store %arg7[%c0_70, %c896], %70 {strides = array<i32>} : memref<16x1792xbf16, #tpu.memory_space<vmem>>, vector<16x128xbf16>,
      %c1_71 = arith.constant 1 : index
      %c1_72 = arith.constant 1 : index
      %c0_73 = arith.constant 0 : index
      %72 = vector.load %arg6[%c1_71, %c1_72, %c0_73] : memref<2x22x128xbf16, #tpu.memory_space<vmem>>, vector<1x16x128xbf16>
      %73 = vector.shape_cast %72 : vector<1x16x128xbf16> to vector<16x128xbf16>
      %c0_74 = arith.constant 0 : index
      %c1024 = arith.constant 1024 : index
      %74 = vector.load %arg7[%c0_74, %c1024] : memref<16x1792xbf16, #tpu.memory_space<vmem>>, vector<16x128xbf16>
      tpu.vector_store %arg7[%c0_74, %c1024], %73 {strides = array<i32>} : memref<16x1792xbf16, #tpu.memory_space<vmem>>, vector<16x128xbf16>,
      %c1_75 = arith.constant 1 : index
      %c2_76 = arith.constant 2 : index
      %c0_77 = arith.constant 0 : index
      %75 = vector.load %arg6[%c1_75, %c2_76, %c0_77] : memref<2x22x128xbf16, #tpu.memory_space<vmem>>, vector<1x16x128xbf16>
      %76 = vector.shape_cast %75 : vector<1x16x128xbf16> to vector<16x128xbf16>
      %c0_78 = arith.constant 0 : index
      %c1152 = arith.constant 1152 : index
      %77 = vector.load %arg7[%c0_78, %c1152] : memref<16x1792xbf16, #tpu.memory_space<vmem>>, vector<16x128xbf16>
      tpu.vector_store %arg7[%c0_78, %c1152], %76 {strides = array<i32>} : memref<16x1792xbf16, #tpu.memory_space<vmem>>, vector<16x128xbf16>,
      %c1_79 = arith.constant 1 : index
      %c3_80 = arith.constant 3 : index
      %c0_81 = arith.constant 0 : index
      %78 = vector.load %arg6[%c1_79, %c3_80, %c0_81] : memref<2x22x128xbf16, #tpu.memory_space<vmem>>, vector<1x16x128xbf16>
      %79 = vector.shape_cast %78 : vector<1x16x128xbf16> to vector<16x128xbf16>
      %c0_82 = arith.constant 0 : index
      %c1280 = arith.constant 1280 : index
      %80 = vector.load %arg7[%c0_82, %c1280] : memref<16x1792xbf16, #tpu.memory_space<vmem>>, vector<16x128xbf16>
      tpu.vector_store %arg7[%c0_82, %c1280], %79 {strides = array<i32>} : memref<16x1792xbf16, #tpu.memory_space<vmem>>, vector<16x128xbf16>,
      %c1_83 = arith.constant 1 : index
      %c4_84 = arith.constant 4 : index
      %c0_85 = arith.constant 0 : index
      %81 = vector.load %arg6[%c1_83, %c4_84, %c0_85] : memref<2x22x128xbf16, #tpu.memory_space<vmem>>, vector<1x16x128xbf16>
      %82 = vector.shape_cast %81 : vector<1x16x128xbf16> to vector<16x128xbf16>
      %c0_86 = arith.constant 0 : index
      %c1408 = arith.constant 1408 : index
      %83 = vector.load %arg7[%c0_86, %c1408] : memref<16x1792xbf16, #tpu.memory_space<vmem>>, vector<16x128xbf16>
      tpu.vector_store %arg7[%c0_86, %c1408], %82 {strides = array<i32>} : memref<16x1792xbf16, #tpu.memory_space<vmem>>, vector<16x128xbf16>,
      %c1_87 = arith.constant 1 : index
      %c5_88 = arith.constant 5 : index
      %c0_89 = arith.constant 0 : index
      %84 = vector.load %arg6[%c1_87, %c5_88, %c0_89] : memref<2x22x128xbf16, #tpu.memory_space<vmem>>, vector<1x16x128xbf16>
      %85 = vector.shape_cast %84 : vector<1x16x128xbf16> to vector<16x128xbf16>
      %c0_90 = arith.constant 0 : index
      %c1536 = arith.constant 1536 : index
      %86 = vector.load %arg7[%c0_90, %c1536] : memref<16x1792xbf16, #tpu.memory_space<vmem>>, vector<16x128xbf16>
      tpu.vector_store %arg7[%c0_90, %c1536], %85 {strides = array<i32>} : memref<16x1792xbf16, #tpu.memory_space<vmem>>, vector<16x128xbf16>,
      %c1_91 = arith.constant 1 : index
      %c6_92 = arith.constant 6 : index
      %c0_93 = arith.constant 0 : index
      %87 = vector.load %arg6[%c1_91, %c6_92, %c0_93] : memref<2x22x128xbf16, #tpu.memory_space<vmem>>, vector<1x16x128xbf16>
      %88 = vector.shape_cast %87 : vector<1x16x128xbf16> to vector<16x128xbf16>
      %c0_94 = arith.constant 0 : index
      %c1664 = arith.constant 1664 : index
      %89 = vector.load %arg7[%c0_94, %c1664] : memref<16x1792xbf16, #tpu.memory_space<vmem>>, vector<16x128xbf16>
      tpu.vector_store %arg7[%c0_94, %c1664], %88 {strides = array<i32>} : memref<16x1792xbf16, #tpu.memory_space<vmem>>, vector<16x128xbf16>,
      %c0_95 = arith.constant 0 : index
      %c0_96 = arith.constant 0 : index
      %90 = vector.load %arg7[%c0_95, %c0_96] : memref<16x1792xbf16, #tpu.memory_space<vmem>>, vector<16x1792xbf16>
      %c0_97 = arith.constant 0 : index
      %c0_98 = arith.constant 0 : index
      %91 = vector.load %arg3[%c0_97, %c0_98] : memref<1792x16xbf16, #tpu.memory_space<vmem>>, vector<1792x16xbf16>
      %cst_99 = arith.constant dense<0.000000e+00> : vector<16x16xf32>
      %92 = tpu.matmul %90, %91, %cst_99 {dimension_numbers = #tpu.dot_dimension_numbers<[1], [0], [0], [1], [0, 0, 1, 1], [], []>} : vector<16x1792xbf16>, vector<1792x16xbf16>, vector<16x16xf32> -> vector<16x16xf32>
      %c0_100 = arith.constant 0 : index
      %c0_101 = arith.constant 0 : index
      %93 = vector.load %arg4[%c0_100, %c0_101] : memref<1x1xf32, #tpu.memory_space<vmem>>, vector<1x1xf32>
      %94 = vector.broadcast %93 : vector<1x1xf32> to vector<16x16xf32>
      %95 = arith.addf %92, %94 : vector<16x16xf32>
      %cst_102 = arith.constant 0.000000e+00 : f32
      %96 = vector.broadcast %cst_102 : f32 to vector<16x16xf32>
      %97 = arith.subf %96, %95 : vector<16x16xf32>
      %98 = math.exp %97 : vector<16x16xf32>
      %cst_103 = arith.constant 1.000000e+00 : f32
      %99 = vector.broadcast %cst_103 : f32 to vector<16x16xf32>
      %100 = arith.addf %99, %98 : vector<16x16xf32>
      %101 = tpu.reciprocal %100 {approx = true} : vector<16x16xf32> -> vector<16x16xf32>
      %c0_104 = arith.constant 0 : index
      %c0_105 = arith.constant 0 : index
      %c0_106 = arith.constant 0 : index
      %102 = vector.load %arg5[%c0_104, %c0_105, %c0_106] : memref<1x16x16xf32, #tpu.memory_space<vmem>>, vector<1x16x16xf32>
      %103 = vector.shape_cast %102 : vector<1x16x16xf32> to vector<16x16xf32>
      %104 = vector.shape_cast %101 : vector<16x16xf32> to vector<1x16x16xf32>
      tpu.vector_store %arg5[%c0_104, %c0_105, %c0_106], %104 {strides = array<i32>} : memref<1x16x16xf32, #tpu.memory_space<vmem>>, vector<1x16x16xf32>,
    } else {
    }
    return
  }
  func.func @transform_0(%arg0: i32, %arg1: i32) -> (i32, i32, i32, i32) {
    %c0_i32 = arith.constant 0 : i32
    %c0_i32_0 = arith.constant 0 : i32
    %c0_i32_1 = arith.constant 0 : i32
    return %arg0, %arg1, %c0_i32, %c0_i32_0 : i32, i32, i32, i32
  }
  func.func @transform_1(%arg0: i32, %arg1: i32) -> (i32, i32) {
    %c0_i32 = arith.constant 0 : i32
    %c0_i32_0 = arith.constant 0 : i32
    %c0_i32_1 = arith.constant 0 : i32
    return %c0_i32, %c0_i32_0 : i32, i32
  }
  func.func @transform_2(%arg0: i32, %arg1: i32) -> (i32, i32) {
    %c0_i32 = arith.constant 0 : i32
    %c0_i32_0 = arith.constant 0 : i32
    %c0_i32_1 = arith.constant 0 : i32
    return %c0_i32, %c0_i32_0 : i32, i32
  }
  func.func @transform_3(%arg0: i32, %arg1: i32) -> (i32, i32, i32) {
    %c0_i32 = arith.constant 0 : i32
    %c0_i32_0 = arith.constant 0 : i32
    %c0_i32_1 = arith.constant 0 : i32
    return %arg0, %c0_i32, %c0_i32_0 : i32, i32, i32
  }
}

</mosaic_0001>

<llo_original>
// kernel: tpu_custom_call.1
$region0: #{tpu_custom_call.1}
  #allocation0 [shape = 'u32[]', space=smem, size = 0x4, offset = 0x4, fixed_abs, tag = 'smem constant byte address 0x4 - core index']
  #allocation1 [shape = 'u32[144,128]{1,0:T(1,128)}', space=vmem, size = 0x12000, scoped, tag = 'internal scratch']
  #allocation2 [shape = 'bf16[2,22,128]{2,1,0:T(8,128)(2,1)}', space=vmem, size = 0x3000, scoped, tag = 'scratch operand']
  #allocation3 [shape = 'bf16[16,1792]{1,0:T(16,128)(2,1)}', space=vmem, size = 0xe000, scoped, tag = 'scratch operand']
  #allocation4 [shape = 'f32[16,16]{1,0:T(8,128)}', space=vmem, size = 0x2000, scoped, tag = 'scratch operand']
  #allocation5 [shape = 'f32[16,16]{1,0:T(8,128)}', space=vmem, size = 0x2000, scoped, tag = 'scratch operand']
  #allocation6 [shape = 'f32[1,1]{1,0:T(1,128)S(1)}', space=vmem, size = 0x200, scoped, tag = 'scoped memory for tpu_custom_call.1']
  %s0 = inlined_call_operand.vmem [shape: f32[2,4,16,16], index: 0, kind: input, shape index: {}]
  %s1 = inlined_call_operand.vmem [shape: bf16[1792,16], index: 1, kind: input, shape index: {}]
  %s2 = inlined_call_operand.<no memory space> [shape: f32[1,1], index: 2, kind: input, shape index: {}]
  %s3 = inlined_call_operand.hbm [shape: f32[2,16,16], index: 3, kind: output, shape index: {}]
  %s4 = sld [smem:[#allocation0]]
  $region53: #{tpu_custom_call.1} parent=0
    _
  %s6 = ssub.s32 1, %s4
  %s7 = scalar_select 0, %s6, %s4
  %v8 = vstv %s2
  %9 = vst [vmem:[#allocation6] sm:$0x1] %v8
  $region1: #{tpu_custom_call.1} parent=0
    #allocation7 [shape = 'u8[16384]{0}', space=vmem, size = 0x4000, scoped, tag = 'output window, operand 0']
    #allocation8 [shape = 's32[2]{0}', space=sflag, size = 0x8, scoped, tag = 'scoped memory for tpu_custom_call.1']
    %10 = vsyncpa [#allocation8], 0
    %s11 = scalar_lea.sflag [#allocation8], 1
    %12 = vsyncpa %s11, 0
    loop: start=0, step=1, limit=4
    $region2: #{tpu_custom_call.1} parent=1 // loop_pre_header
      _
    $region3: #{tpu_custom_call.1} parent=1 // loop_header
      %s14 = sphi 0, %s18
      %p15 = scmp.ge.s32.totalorder %s14, 4
      %s21 = sphi 0, %s33
      %s22 = sphi 0, %s29
      %s23 = sphi 0, %s21
      %s24 = sphi 0, %s22
      %s25 = sphi 0, %s23
      %s26 = sphi 0, %s24
      %s38 = sphi 0, %s40
      %s41 = sphi 0, %s38
      %s42 = sphi 0, %s41
      %s58 = sphi 0, %s42
      %s62 = sphi 0, %s62
      %s64 = sphi 0, %s62
      %s65 = sphi 0, %s64
      %s79 = sphi 0, %s65
      %s83 = sphi 0, %s83
      %s85 = sphi 0, %s83
      %s86 = sphi 0, %s85
      %s100 = sphi 0, %s86
      %s106 = sphi 0, %s108
      %s109 = sphi 0, %s106
      %s110 = sphi 0, %s109
      %s126 = sphi 0, %s110
    $region4: #{tpu_custom_call.1} parent=1 // loop_header_branch
      %17 = sbr.rel (%p15) target = $region8
    $region5: #{tpu_custom_call.1} parent=1 // loop_body
      %s19 = ssub.s32 %s14, 1
      %s20 = ssub.s32 %s14, 2
      %s27 = sadd.s32 1, %s22
      %p28 = scmp.ge.s32.totalorder %s27, 1
      %s29 = scalar_select %p28, 0, %s27
      %s30 = sadd.s32 1, %s21
      %s31 = scalar_select %p28, %s30, %s21
      %p32 = scmp.ge.s32.totalorder %s31, 2
      %s33 = scalar_select %p32, 0, %s31
      %s34 = ssub.s32 %s21, %s33
      %s35 = ssub.s32 %s22, %s29
      %s36 = sor.u32 %s34, %s35
      %p37 = scmp.eq.s32.totalorder %s36, 0
      %s39 = sadd.s32 %s38, 1
      %s40 = scalar_select %p37, %s38, %s39
      %p43 = pneg %p37
      %p44 = scmp.eq.s32.totalorder %s14, 1
      %p45 = por %p43, %p44
      %p46 = scmp.ne.s32.totalorder %s38, %s41
      %p47 = scmp.eq.s32.totalorder %s14, 0
      %p48 = por %p46, %p47
      %p49 = scmp.ne.s32.totalorder %s38, %s41
      %p50 = scmp.eq.s32.totalorder %s19, 1
      %p51 = por %p49, %p50
      %p52 = scmp.ne.s32.totalorder %s41, %s42
      %p53 = scmp.eq.s32.totalorder %s19, 0
      %p54 = por %p52, %p53
      %p55 = scmp.ne.s32.totalorder %s41, %s42
      %p56 = scmp.eq.s32.totalorder %s20, 1
      %p57 = por %p55, %p56
      %p59 = scmp.ne.s32.totalorder %s42, %s58
      %p60 = scmp.eq.s32.totalorder %s20, 0
      %p61 = por %p59, %p60
      %s63 = sadd.s32 %s62, 1
      %p66 = scmp.eq.s32.totalorder %s14, 1
      %p67 = scmp.ne.s32.totalorder %s62, %s64
      %p68 = scmp.eq.s32.totalorder %s14, 0
      %p69 = por %p67, %p68
      %p70 = scmp.ne.s32.totalorder %s62, %s64
      %p71 = scmp.eq.s32.totalorder %s19, 1
      %p72 = por %p70, %p71
      %p73 = scmp.ne.s32.totalorder %s64, %s65
      %p74 = scmp.eq.s32.totalorder %s19, 0
      %p75 = por %p73, %p74
      %p76 = scmp.ne.s32.totalorder %s64, %s65
      %p77 = scmp.eq.s32.totalorder %s20, 1
      %p78 = por %p76, %p77
      %p80 = scmp.ne.s32.totalorder %s65, %s79
      %p81 = scmp.eq.s32.totalorder %s20, 0
      %p82 = por %p80, %p81
      %s84 = sadd.s32 %s83, 1
      %p87 = scmp.eq.s32.totalorder %s14, 1
      %p88 = scmp.ne.s32.totalorder %s83, %s85
      %p89 = scmp.eq.s32.totalorder %s14, 0
      %p90 = por %p88, %p89
      %p91 = scmp.ne.s32.totalorder %s83, %s85
      %p92 = scmp.eq.s32.totalorder %s19, 1
      %p93 = por %p91, %p92
      %p94 = scmp.ne.s32.totalorder %s85, %s86
      %p95 = scmp.eq.s32.totalorder %s19, 0
      %p96 = por %p94, %p95
      %p97 = scmp.ne.s32.totalorder %s85, %s86
      %p98 = scmp.eq.s32.totalorder %s20, 1
      %p99 = por %p97, %p98
      %p101 = scmp.ne.s32.totalorder %s86, %s100
      %p102 = scmp.eq.s32.totalorder %s20, 0
      %p103 = por %p101, %p102
      %s104 = ssub.s32 %s21, %s33
      %p105 = scmp.eq.s32.totalorder %s104, 0
      %s107 = sadd.s32 %s106, 1
      %s108 = scalar_select %p105, %s106, %s107
      %p111 = pneg %p105
      %p112 = scmp.eq.s32.totalorder %s14, 1
      %p113 = por %p111, %p112
      %p114 = scmp.ne.s32.totalorder %s106, %s109
      %p115 = scmp.eq.s32.totalorder %s14, 0
      %p116 = por %p114, %p115
      %p117 = scmp.ne.s32.totalorder %s106, %s109
      %p118 = scmp.eq.s32.totalorder %s19, 1
      %p119 = por %p117, %p118
      %p120 = scmp.ne.s32.totalorder %s109, %s110
      %p121 = scmp.eq.s32.totalorder %s19, 0
      %p122 = por %p120, %p121
      %p123 = scmp.ne.s32.totalorder %s109, %s110
      %p124 = scmp.eq.s32.totalorder %s20, 1
      %p125 = por %p123, %p124
      %p127 = scmp.ne.s32.totalorder %s110, %s126
      %p128 = scmp.eq.s32.totalorder %s20, 0
      %p129 = por %p127, %p128
      %p130 = scmp.le.s32.totalorder 1, %s14
      %p131 = scmp.lt.s32.totalorder %s14, 3
      %p132 = pnand %p130, %p131
      %p133 = pneg %p132
      // Predicated region
      $region9: #{tpu_custom_call.1} parent=5 // pred_check
        _
      $region10: #{tpu_custom_call.1} parent=5 // pred_check_branch
        %135 = sbr.rel (%p132) target = $region12
      $region11: #{tpu_custom_call.1} parent=5 // pred_region
        %s136 = ssub.s32 %s14, 1
        // Predicated region
        $region13: #{tpu_custom_call.1} parent=11 // pred_check
          %p137 = pneg %p75
        $region14: #{tpu_custom_call.1} parent=11 // pred_check_branch
          %139 = sbr.rel (%p137) target = $region16
        $region15: #{tpu_custom_call.1} parent=11 // pred_region
          _
        $region16: #{tpu_custom_call.1} parent=11 // pred_fallthru
          _
        // Predicated region
        $region17: #{tpu_custom_call.1} parent=11 // pred_check
          %p140 = pneg %p96
        $region18: #{tpu_custom_call.1} parent=11 // pred_check_branch
          %142 = sbr.rel (%p140) target = $region20
        $region19: #{tpu_custom_call.1} parent=11 // pred_region
          _
        $region20: #{tpu_custom_call.1} parent=11 // pred_fallthru
          _
      $region12: #{tpu_custom_call.1} parent=5 // pred_fallthru
        _
      %p143 = scmp.lt.s32.totalorder %s14, 2
      // Predicated region
      $region21: #{tpu_custom_call.1} parent=5 // pred_check
        %p144 = pneg %p143
      $region22: #{tpu_custom_call.1} parent=5 // pred_check_branch
        %146 = sbr.rel (%p144) target = $region24
      $region23: #{tpu_custom_call.1} parent=5 // pred_region
        // Predicated region
        $region25: #{tpu_custom_call.1} parent=23 // pred_check
          %p147 = pneg %p48
        $region26: #{tpu_custom_call.1} parent=23 // pred_check_branch
          %149 = sbr.rel (%p147) target = $region28
        $region27: #{tpu_custom_call.1} parent=23 // pred_region
          %s150 = smul.u32 4, %s22
          %p151 = scmp.lt.s32.totalorder %s21, 1
          %s152 = scalar_select %p151, %s21, 1
          %p153 = scmp.lt.s32.totalorder %s150, 3
          %s154 = scalar_select %p153, %s150, 3
          %s155 = smul.addr %s154, 2
          %s156 = smul.addr %s152, 8
          %s157 = sadd.s32 %s155, %s156
          %s158 = smul.addr %s157, 8
          %s159 = scalar_lea.vmem %s0, %s158
          %s160 = smul.u32 4, %s22
        $region28: #{tpu_custom_call.1} parent=23 // pred_fallthru
          _
      $region24: #{tpu_custom_call.1} parent=5 // pred_fallthru
        _
      %p161 = scmp.le.s32.totalorder 1, %s14
      %p162 = scmp.lt.s32.totalorder %s14, 3
      %p163 = pnand %p161, %p162
      %p164 = pneg %p163
      // Predicated region
      $region29: #{tpu_custom_call.1} parent=5 // pred_check
        _
      $region30: #{tpu_custom_call.1} parent=5 // pred_check_branch
        %166 = sbr.rel (%p163) target = $region32
      $region31: #{tpu_custom_call.1} parent=5 // pred_region
        %s167 = ssub.s32 %s14, 1
        %s168 = smul.u32 4, %s24
        %p169 = scmp.lt.s32.totalorder %s23, 1
        %s170 = scalar_select %p169, %s23, 1
        %p171 = scmp.lt.s32.totalorder %s168, 3
        %s172 = scalar_select %p171, %s168, 3
        %s173 = smul.addr %s172, 2
        %s174 = smul.addr %s170, 8
        %s175 = sadd.s32 %s173, %s174
        %s176 = smul.addr %s175, 8
        %s177 = scalar_lea.vmem %s0, %s176
        %p178 = pneg %p54
        %p179 = pneg %p51
        %p180 = pneg %p75
        %p181 = pneg %p72
        %p182 = pneg %p96
        %p183 = pneg %p93
        %p184 = pneg %p122
        %p185 = pneg %p119
        %s186 = sand.u32 %s109, 1
        %s187 = scalar_lea.sflag [#allocation8], %s186
        %s188 = sand.u32 %s109, 1
        %s189 = smul.addr %s188, 16
        %s190 = scalar_lea.vmem [#allocation7], %s189
        %s191 = smul.u32 4, %s24
        %p192 = scmp.lt.s32.totalorder %s23, 1
        %s193 = scalar_select %p192, %s23, 1
        %p194 = scmp.lt.s32.totalorder %s191, 3
        %s195 = scalar_select %p194, %s191, 3
        %s196 = smul.addr %s195, 2
        %s197 = smul.addr %s193, 8
        %s198 = sadd.s32 %s196, %s197
        %s199 = smul.addr %s198, 8
        %s200 = scalar_lea.vmem %s0, %s199
        %s201 = smul.u32 4, %s24
        %p203 = scmp.eq.s32.totalorder %s24, 0
        // Predicated region
        $region33: #{tpu_custom_call.1} parent=31 // pred_check
          %p204 = pneg %p203
        $region34: #{tpu_custom_call.1} parent=31 // pred_check_branch
          %206 = sbr.rel (%p204) target = $region36
        $region35: #{tpu_custom_call.1} parent=31 // pred_region
          %vm207 = vcmask 130048
          %208 = vst.msk [vmem:[#allocation4] sm:$0xff] %vm207, 0.0
          %209 = vst.msk [vmem:[#allocation4 + $0x8] sm:$0xff] %vm207, 0.0
          %210 = vst.msk [vmem:[#allocation5] sm:$0xff] %vm207, -inf
          %211 = vst.msk [vmem:[#allocation5 + $0x8] sm:$0xff] %vm207, -inf
        $region36: #{tpu_custom_call.1} parent=31 // pred_fallthru
          _
        %v212 = vld [vmem:[#allocation4] sm:$0xff]
        %v213 = vld [vmem:[#allocation4 + $0x8] sm:$0xff]
        %v214 = vld [vmem:[#allocation5] sm:$0xff]
        %v215 = vld [vmem:[#allocation5 + $0x8] sm:$0xff]
        %v216 = vld [vmem:[%s200] sm:$0xff]
        %v217 = vld [vmem:[%s200 + $0x8] sm:$0xff]
        %v218 = vadd.f32 %v212, %v216
        %v219 = vadd.f32 %v213, %v217
        %v220 = vmax.f32 %v214, %v216
        %v221 = vmax.f32 %v215, %v217
        %s222 = scalar_lea.vmem %s200, 16
        %v223 = vld [vmem:[%s222] sm:$0xff]
        %v224 = vld [vmem:[%s222 + $0x8] sm:$0xff]
        %v225 = vadd.f32 %v218, %v223
        %v226 = vadd.f32 %v219, %v224
        %v227 = vmax.f32 %v220, %v223
        %v228 = vmax.f32 %v221, %v224
        %s229 = scalar_lea.vmem %s200, 32
        %v230 = vld [vmem:[%s229] sm:$0xff]
        %v231 = vld [vmem:[%s229 + $0x8] sm:$0xff]
        %v232 = vadd.f32 %v225, %v230
        %v233 = vadd.f32 %v226, %v231
        %v234 = vmax.f32 %v227, %v230
        %v235 = vmax.f32 %v228, %v231
        %s236 = scalar_lea.vmem %s200, 48
        %v237 = vld [vmem:[%s236] sm:$0xff]
        %v238 = vld [vmem:[%s236 + $0x8] sm:$0xff]
        %v239 = vadd.f32 %v232, %v237
        %v240 = vadd.f32 %v233, %v238
        %v241 = vmax.f32 %v234, %v237
        %v242 = vmax.f32 %v235, %v238
        %vm243 = vcmask 130048
        %244 = vst.msk [vmem:[#allocation4] sm:$0xff] %vm243, %v239
        %245 = vst.msk [vmem:[#allocation4 + $0x8] sm:$0xff] %vm243, %v240
        %246 = vst.msk [vmem:[#allocation5] sm:$0xff] %vm243, %v241
        %247 = vst.msk [vmem:[#allocation5 + $0x8] sm:$0xff] %vm243, %v242
        // Predicated region
        $region37: #{tpu_custom_call.1} parent=31 // pred_check
          %p248 = pneg %p203
        $region38: #{tpu_custom_call.1} parent=31 // pred_check_branch
          %250 = sbr.rel (%p248) target = $region40
        $region39: #{tpu_custom_call.1} parent=31 // pred_region
          %v251 = vmul.f32 %v239, 0.25
          %v252 = vmul.f32 %v240, 0.25
          %vm253 = vcmask 1041408
          %vm254 = vsmask.f32 1280
          %vm255 = vmand %vm253, %vm254
          %v256 = vld [vmem:[#allocation2] sm:$0x3]
          %v257 = vsel %vm255, 0, %v256
          %258 = vst [vmem:[#allocation2] sm:$0x3] %v257
          %v259 = vld [vmem:[#allocation2 + $0xc] sm:$0x3]
          %v260 = vsel %vm255, 0, %v259
          %261 = vst [vmem:[#allocation2 + $0xc] sm:$0x3] %v260
          %vm262 = vcmask 1042433
          %vm263 = vsmask.f32 7942
          %vm264 = vmand %vm262, %vm263
          %v265 = vld [vmem:[#allocation2 + $0x8] sm:$0x6]
          %v266 = vsel %vm264, 0, %v265
          %267 = vst [vmem:[#allocation2 + $0x8] sm:$0x6] %v266
          %v268 = vld [vmem:[#allocation2 + $0x14] sm:$0x6]
          %v269 = vsel %vm264, 0, %v268
          %270 = vst [vmem:[#allocation2 + $0x14] sm:$0x6] %v269
          %vm271 = vcmask 19457
          %vm272 = vmand %vm271, %vm263
          %v273 = vld [vmem:[#allocation2] sm:$0xe]
          %v274 = vsel %vm272, 0, %v273
          %275 = vst [vmem:[#allocation2] sm:$0xe] %v274
          %vm276 = vcmask 19456
          %277 = vst.msk [vmem:[#allocation2 + $0x4] sm:$0xf] %vm276, 0
          %vm278 = vcmask 17408
          %vm279 = vmand %vm278, %vm254
          %v280 = vld [vmem:[#allocation2 + $0x8] sm:$0x3]
          %v281 = vsel %vm279, 0, %v280
          %282 = vst [vmem:[#allocation2 + $0x8] sm:$0x3] %v281
          %v283 = vld [vmem:[#allocation2 + $0xc] sm:$0xe]
          %v284 = vsel %vm272, 0, %v283
          %285 = vst [vmem:[#allocation2 + $0xc] sm:$0xe] %v284
          %286 = vst.msk [vmem:[#allocation2 + $0x10] sm:$0xf] %vm276, 0
          %v287 = vld [vmem:[#allocation2 + $0x14] sm:$0x3]
          %v288 = vsel %vm279, 0, %v287
          %289 = vst [vmem:[#allocation2 + $0x14] sm:$0x3] %v288
          %vm290 = vcmask 1043609
          %vm291 = vmand %vm290, %vm263
          %v292 = vld [vmem:[#allocation2] sm:$0xe]
          %v293 = vsel %vm291, 0, %v292
          %294 = vst [vmem:[#allocation2] sm:$0xe] %v293
          %vm295 = vcmask 1043608
          %296 = vst.msk [vmem:[#allocation2 + $0x4] sm:$0xf] %vm295, 0
          %vm297 = vcmask 1041560
          %vm298 = vmand %vm297, %vm254
          %v299 = vld [vmem:[#allocation2 + $0x8] sm:$0x3]
          %v300 = vsel %vm298, 0, %v299
          %301 = vst [vmem:[#allocation2 + $0x8] sm:$0x3] %v300
          %v302 = vld [vmem:[#allocation2 + $0xc] sm:$0xe]
          %v303 = vsel %vm291, 0, %v302
          %304 = vst [vmem:[#allocation2 + $0xc] sm:$0xe] %v303
          %305 = vst.msk [vmem:[#allocation2 + $0x10] sm:$0xf] %vm295, 0
          %v306 = vld [vmem:[#allocation2 + $0x14] sm:$0x3]
          %v307 = vsel %vm298, 0, %v306
          %308 = vst [vmem:[#allocation2 + $0x14] sm:$0x3] %v307
          %v309 = vpack.c.bf16 %v252, %v251
          %v311 = vunpack.c.l.b16 %v309
          %v312 = vunpack.c.h.b16 %v309
          %v313 = vpack.c.b16 %v311, %v311
          %v314 = vpack.c.b16 %v312, %v312
          %vm315 = vsmask.f32 5392
          %vm316 = vmor %vm254, %vm315
          %v318 = vshrl.u32 %v313, 16
          %v320 = vrot.slane %v318, 6
          %v321 = vshll.u32 %v313, 16
          %v323 = vrot.slane %v321, 7
          %v324 = vor.u32 %v320, %v323
          %v325 = vrot.slane %v324, 4
          %v327 = vshrl.u32 %v314, 16
          %v329 = vrot.slane %v327, 6
          %v330 = vshll.u32 %v314, 16
          %v332 = vrot.slane %v330, 7
          %v333 = vor.u32 %v329, %v332
          %v334 = vsel %vm316, %v325, %v333
          %v335 = vrot.slane %v333, 4
          %336 = vrot.lane.b32.xlu0 %v324, 3
          %v337 = vpop.permute.xlu0 %336
          %338 = vrot.lane.b32.xlu0 %v334, 3
          %v339 = vpop.permute.xlu0 %338
          %340 = vrot.lane.b32.xlu0 %v335, 3
          %v341 = vpop.permute.xlu0 %340
          %vm345 = vcmask 150553
          %vm346 = vmand %vm345, %vm263
          %v347 = vld [vmem:[#allocation2] sm:$0xe]
          %v348 = vsel %vm346, %v337, %v347
          %349 = vst [vmem:[#allocation2] sm:$0xe] %v348
          %vm350 = vcmask 150552
          %351 = vst.msk [vmem:[#allocation2 + $0x4] sm:$0xf] %vm350, %v339
          %vm352 = vcmask 148504
          %vm353 = vmand %vm352, %vm254
          %v354 = vld [vmem:[#allocation2 + $0x8] sm:$0x3]
          %v355 = vsel %vm353, %v341, %v354
          %356 = vst [vmem:[#allocation2 + $0x8] sm:$0x3] %v355
          %v357 = vpack.c.bf16 %v242, %v241
          %v359 = vunpack.c.l.b16 %v357
          %v360 = vunpack.c.h.b16 %v357
          %v361 = vpack.c.b16 %v359, %v359
          %v362 = vpack.c.b16 %v360, %v360
          %v364 = vshrl.u32 %v361, 16
          %v366 = vrot.slane %v364, 6
          %v367 = vshll.u32 %v361, 16
          %v369 = vrot.slane %v367, 7
          %v370 = vor.u32 %v366, %v369
          %v371 = vrot.slane %v370, 4
          %v373 = vshrl.u32 %v362, 16
          %v375 = vrot.slane %v373, 6
          %v376 = vshll.u32 %v362, 16
          %v378 = vrot.slane %v376, 7
          %v379 = vor.u32 %v375, %v378
          %v380 = vsel %vm316, %v371, %v379
          %v381 = vrot.slane %v379, 4
          %382 = vrot.lane.b32.xlu0 %v370, 3
          %v383 = vpop.permute.xlu0 %382
          %384 = vrot.lane.b32.xlu0 %v380, 3
          %v385 = vpop.permute.xlu0 %384
          %386 = vrot.lane.b32.xlu0 %v381, 3
          %v387 = vpop.permute.xlu0 %386
          %s391 = scalar_lea.vmem [#allocation2], 12
          %v392 = vld [vmem:[%s391] sm:$0xe]
          %v393 = vsel %vm346, %v383, %v392
          %394 = vst [vmem:[%s391] sm:$0xe] %v393
          %395 = vst.msk [vmem:[%s391 + $0x4] sm:$0xf] %vm350, %v385
          %v396 = vld [vmem:[%s391 + $0x8] sm:$0x3]
          %v397 = vsel %vm353, %v387, %v396
          %398 = vst [vmem:[%s391 + $0x8] sm:$0x3] %v397
          %v399 = vld [vmem:[#allocation2] sm:$0xf]
          %v400 = vld [vmem:[#allocation2 + $0x4] sm:$0xf]
          %v403 = vunpack.c.l.b16 %v399
          %v404 = vunpack.c.l.b16 %v400
          %v405 = vpack.c.b16 %v404, %v403
          %407 = vst [vmem:[#allocation3] sm:$0xff] %v405
          %v408 = vld [vmem:[#allocation2] sm:$0xf]
          %v409 = vld [vmem:[#allocation2 + $0x4] sm:$0xf]
          %v410 = vld [vmem:[#allocation2 + $0x8] sm:$0x1]
          %v414 = vunpack.c.l.b16 %v408
          %v415 = vunpack.c.l.b16 %v409
          %v416 = vunpack.c.l.b16 %v410
          %v417 = vpack.c.b16 %v415, %v414
          %v418 = vpack.c.b16 %v416, %v416
          %vm419 = vsmask.f32 7424
          %v421 = vshrl.u32 %v417, 16
          %v423 = vshll.u32 %v417, 16
          %v425 = vrot.slane %v423, 1
          %v426 = vor.u32 %v421, %v425
          %v428 = vshll.u32 %v418, 16
          %v430 = vrot.slane %v428, 1
          %v431 = vsel %vm419, %v426, %v430
          %433 = vst [vmem:[#allocation3 + $0x8] sm:$0xff] %v431
          %v434 = vld [vmem:[#allocation2] sm:$0xe]
          %v435 = vld [vmem:[#allocation2 + $0x4] sm:$0xf]
          %v436 = vld [vmem:[#allocation2 + $0x8] sm:$0x1]
          %v440 = vunpack.c.l.b16 %v434
          %v441 = vunpack.c.l.b16 %v435
          %v442 = vunpack.c.l.b16 %v436
          %v443 = vpack.c.b16 %v441, %v440
          %v444 = vpack.c.b16 %v442, %v442
          %vm445 = vcmask 1046528
          %v446 = vrot.slane %v443, 1
          %v447 = vrot.slane %v444, 1
          %v448 = vsel %vm445, %v446, %v447
          %450 = vst [vmem:[#allocation3 + $0x10] sm:$0xff] %v448
          %v451 = vld [vmem:[#allocation2] sm:$0xe]
          %v452 = vld [vmem:[#allocation2 + $0x4] sm:$0xf]
          %v453 = vld [vmem:[#allocation2 + $0x8] sm:$0x3]
          %v457 = vunpack.c.l.b16 %v451
          %v458 = vunpack.c.l.b16 %v452
          %v459 = vunpack.c.l.b16 %v453
          %v460 = vpack.c.b16 %v458, %v457
          %v461 = vpack.c.b16 %v459, %v459
          %vm462 = vsmask.f32 6400
          %v464 = vshrl.u32 %v460, 16
          %v466 = vrot.slane %v464, 1
          %v467 = vshll.u32 %v460, 16
          %v469 = vrot.slane %v467, 2
          %v470 = vor.u32 %v466, %v469
          %v472 = vshrl.u32 %v461, 16
          %v474 = vrot.slane %v472, 1
          %v475 = vshll.u32 %v461, 16
          %v477 = vrot.slane %v475, 2
          %v478 = vor.u32 %v474, %v477
          %v479 = vsel %vm462, %v470, %v478
          %481 = vst [vmem:[#allocation3 + $0x18] sm:$0xff] %v479
          %v482 = vld [vmem:[#allocation2] sm:$0xc]
          %v483 = vld [vmem:[#allocation2 + $0x4] sm:$0xf]
          %v484 = vld [vmem:[#allocation2 + $0x8] sm:$0x3]
          %v488 = vunpack.c.l.b16 %v482
          %v489 = vunpack.c.l.b16 %v483
          %v490 = vunpack.c.l.b16 %v484
          %v491 = vpack.c.b16 %v489, %v488
          %v492 = vpack.c.b16 %v490, %v490
          %vm493 = vcmask 1045504
          %v494 = vrot.slane %v491, 2
          %v495 = vrot.slane %v492, 2
          %v496 = vsel %vm493, %v494, %v495
          %498 = vst [vmem:[#allocation3 + $0x20] sm:$0xff] %v496
          %v499 = vld [vmem:[#allocation2] sm:$0xc]
          %v500 = vld [vmem:[#allocation2 + $0x4] sm:$0xf]
          %v501 = vld [vmem:[#allocation2 + $0x8] sm:$0x7]
          %v505 = vunpack.c.l.b16 %v499
          %v506 = vunpack.c.l.b16 %v500
          %v507 = vunpack.c.l.b16 %v501
          %v508 = vpack.c.b16 %v506, %v505
          %v509 = vpack.c.b16 %v507, %v507
          %vm510 = vsmask.f32 5376
          %v512 = vshrl.u32 %v508, 16
          %v514 = vrot.slane %v512, 2
          %v515 = vshll.u32 %v508, 16
          %v517 = vrot.slane %v515, 3
          %v518 = vor.u32 %v514, %v517
          %v520 = vshrl.u32 %v509, 16
          %v522 = vrot.slane %v520, 2
          %v523 = vshll.u32 %v509, 16
          %v525 = vrot.slane %v523, 3
          %v526 = vor.u32 %v522, %v525
          %v527 = vsel %vm510, %v518, %v526
          %529 = vst [vmem:[#allocation3 + $0x28] sm:$0xff] %v527
          %v530 = vld [vmem:[#allocation2] sm:$0x8]
          %v531 = vld [vmem:[#allocation2 + $0x4] sm:$0xf]
          %v532 = vld [vmem:[#allocation2 + $0x8] sm:$0x7]
          %v536 = vunpack.c.l.b16 %v530
          %v537 = vunpack.c.l.b16 %v531
          %v538 = vunpack.c.l.b16 %v532
          %v539 = vpack.c.b16 %v537, %v536
          %v540 = vpack.c.b16 %v538, %v538
          %vm541 = vcmask 1044480
          %v542 = vrot.slane %v539, 3
          %v543 = vrot.slane %v540, 3
          %v544 = vsel %vm541, %v542, %v543
          %546 = vst [vmem:[#allocation3 + $0x30] sm:$0xff] %v544
          %v547 = vld [vmem:[%s391] sm:$0xf]
          %v548 = vld [vmem:[%s391 + $0x4] sm:$0xf]
          %v551 = vunpack.c.l.b16 %v547
          %v552 = vunpack.c.l.b16 %v548
          %v553 = vpack.c.b16 %v552, %v551
          %555 = vst [vmem:[#allocation3 + $0x38] sm:$0xff] %v553
          %v556 = vld [vmem:[%s391] sm:$0xf]
          %v557 = vld [vmem:[%s391 + $0x4] sm:$0xf]
          %v558 = vld [vmem:[%s391 + $0x8] sm:$0x1]
          %v562 = vunpack.c.l.b16 %v556
          %v563 = vunpack.c.l.b16 %v557
          %v564 = vunpack.c.l.b16 %v558
          %v565 = vpack.c.b16 %v563, %v562
          %v566 = vpack.c.b16 %v564, %v564
          %v568 = vshrl.u32 %v565, 16
          %v570 = vshll.u32 %v565, 16
          %v572 = vrot.slane %v570, 1
          %v573 = vor.u32 %v568, %v572
          %v575 = vshll.u32 %v566, 16
          %v577 = vrot.slane %v575, 1
          %v578 = vsel %vm419, %v573, %v577
          %580 = vst [vmem:[#allocation3 + $0x40] sm:$0xff] %v578
          %v581 = vld [vmem:[%s391] sm:$0xe]
          %v582 = vld [vmem:[%s391 + $0x4] sm:$0xf]
          %v583 = vld [vmem:[%s391 + $0x8] sm:$0x1]
          %v587 = vunpack.c.l.b16 %v581
          %v588 = vunpack.c.l.b16 %v582
          %v589 = vunpack.c.l.b16 %v583
          %v590 = vpack.c.b16 %v588, %v587
          %v591 = vpack.c.b16 %v589, %v589
          %v592 = vrot.slane %v590, 1
          %v593 = vrot.slane %v591, 1
          %v594 = vsel %vm445, %v592, %v593
          %596 = vst [vmem:[#allocation3 + $0x48] sm:$0xff] %v594
          %v597 = vld [vmem:[%s391] sm:$0xe]
          %v598 = vld [vmem:[%s391 + $0x4] sm:$0xf]
          %v599 = vld [vmem:[%s391 + $0x8] sm:$0x3]
          %v603 = vunpack.c.l.b16 %v597
          %v604 = vunpack.c.l.b16 %v598
          %v605 = vunpack.c.l.b16 %v599
          %v606 = vpack.c.b16 %v604, %v603
          %v607 = vpack.c.b16 %v605, %v605
          %v609 = vshrl.u32 %v606, 16
          %v611 = vrot.slane %v609, 1
          %v612 = vshll.u32 %v606, 16
          %v614 = vrot.slane %v612, 2
          %v615 = vor.u32 %v611, %v614
          %v617 = vshrl.u32 %v607, 16
          %v619 = vrot.slane %v617, 1
          %v620 = vshll.u32 %v607, 16
          %v622 = vrot.slane %v620, 2
          %v623 = vor.u32 %v619, %v622
          %v624 = vsel %vm462, %v615, %v623
          %626 = vst [vmem:[#allocation3 + $0x50] sm:$0xff] %v624
          %v627 = vld [vmem:[%s391] sm:$0xc]
          %v628 = vld [vmem:[%s391 + $0x4] sm:$0xf]
          %v629 = vld [vmem:[%s391 + $0x8] sm:$0x3]
          %v633 = vunpack.c.l.b16 %v627
          %v634 = vunpack.c.l.b16 %v628
          %v635 = vunpack.c.l.b16 %v629
          %v636 = vpack.c.b16 %v634, %v633
          %v637 = vpack.c.b16 %v635, %v635
          %v638 = vrot.slane %v636, 2
          %v639 = vrot.slane %v637, 2
          %v640 = vsel %vm493, %v638, %v639
          %642 = vst [vmem:[#allocation3 + $0x58] sm:$0xff] %v640
          %v643 = vld [vmem:[%s391] sm:$0xc]
          %v644 = vld [vmem:[%s391 + $0x4] sm:$0xf]
          %v645 = vld [vmem:[%s391 + $0x8] sm:$0x7]
          %v649 = vunpack.c.l.b16 %v643
          %v650 = vunpack.c.l.b16 %v644
          %v651 = vunpack.c.l.b16 %v645
          %v652 = vpack.c.b16 %v650, %v649
          %v653 = vpack.c.b16 %v651, %v651
          %v655 = vshrl.u32 %v652, 16
          %v657 = vrot.slane %v655, 2
          %v658 = vshll.u32 %v652, 16
          %v660 = vrot.slane %v658, 3
          %v661 = vor.u32 %v657, %v660
          %v663 = vshrl.u32 %v653, 16
          %v665 = vrot.slane %v663, 2
          %v666 = vshll.u32 %v653, 16
          %v668 = vrot.slane %v666, 3
          %v669 = vor.u32 %v665, %v668
          %v670 = vsel %vm510, %v661, %v669
          %672 = vst [vmem:[#allocation3 + $0x60] sm:$0xff] %v670
          %v673 = vld [vmem:[%s391] sm:$0x8]
          %v674 = vld [vmem:[%s391 + $0x4] sm:$0xf]
          %v675 = vld [vmem:[%s391 + $0x8] sm:$0x7]
          %v679 = vunpack.c.l.b16 %v673
          %v680 = vunpack.c.l.b16 %v674
          %v681 = vunpack.c.l.b16 %v675
          %v682 = vpack.c.b16 %v680, %v679
          %v683 = vpack.c.b16 %v681, %v681
          %v684 = vrot.slane %v682, 3
          %v685 = vrot.slane %v683, 3
          %v686 = vsel %vm541, %v684, %v685
          %688 = vst [vmem:[#allocation3 + $0x68] sm:$0xff] %v686
          %v689 = vld [vmem:[#allocation3] sm:$0xff]
          %v690 = vld [vmem:[#allocation3 + $0x8] sm:$0xff]
          %v691 = vld [vmem:[#allocation3 + $0x10] sm:$0xff]
          %v692 = vld [vmem:[#allocation3 + $0x18] sm:$0xff]
          %v693 = vld [vmem:[#allocation3 + $0x20] sm:$0xff]
          %v694 = vld [vmem:[#allocation3 + $0x28] sm:$0xff]
          %v695 = vld [vmem:[#allocation3 + $0x30] sm:$0xff]
          %v696 = vld [vmem:[#allocation3 + $0x38] sm:$0xff]
          %v697 = vld [vmem:[#allocation3 + $0x40] sm:$0xff]
          %v698 = vld [vmem:[#allocation3 + $0x48] sm:$0xff]
          %v699 = vld [vmem:[#allocation3 + $0x50] sm:$0xff]
          %v700 = vld [vmem:[#allocation3 + $0x58] sm:$0xff]
          %v701 = vld [vmem:[#allocation3 + $0x60] sm:$0xff]
          %v702 = vld [vmem:[#allocation3 + $0x68] sm:$0xff]
          %v703 = vld [vmem:[%s1] sm:$0xf]
          %v704 = vld [vmem:[%s1 + $0x4] sm:$0xf]
          %v705 = vld [vmem:[%s1 + $0x8] sm:$0xf]
          %v706 = vld [vmem:[%s1 + $0xc] sm:$0xf]
          %v707 = vld [vmem:[%s1 + $0x10] sm:$0xf]
          %v708 = vld [vmem:[%s1 + $0x14] sm:$0xf]
          %v709 = vld [vmem:[%s1 + $0x18] sm:$0xf]
          %v710 = vld [vmem:[%s1 + $0x1c] sm:$0xf]
          %v711 = vld [vmem:[%s1 + $0x20] sm:$0xf]
          %v712 = vld [vmem:[%s1 + $0x24] sm:$0xf]
          %v713 = vld [vmem:[%s1 + $0x28] sm:$0xf]
          %v714 = vld [vmem:[%s1 + $0x2c] sm:$0xf]
          %v715 = vld [vmem:[%s1 + $0x30] sm:$0xf]
          %v716 = vld [vmem:[%s1 + $0x34] sm:$0xf]
          %v717 = vld [vmem:[%s1 + $0x38] sm:$0xf]
          %v718 = vld [vmem:[%s1 + $0x3c] sm:$0xf]
          %v719 = vld [vmem:[%s1 + $0x40] sm:$0xf]
          %v720 = vld [vmem:[%s1 + $0x44] sm:$0xf]
          %v721 = vld [vmem:[%s1 + $0x48] sm:$0xf]
          %v722 = vld [vmem:[%s1 + $0x4c] sm:$0xf]
          %v723 = vld [vmem:[%s1 + $0x50] sm:$0xf]
          %v724 = vld [vmem:[%s1 + $0x54] sm:$0xf]
          %v725 = vld [vmem:[%s1 + $0x58] sm:$0xf]
          %v726 = vld [vmem:[%s1 + $0x5c] sm:$0xf]
          %v727 = vld [vmem:[%s1 + $0x60] sm:$0xf]
          %v728 = vld [vmem:[%s1 + $0x64] sm:$0xf]
          %v729 = vld [vmem:[%s1 + $0x68] sm:$0xf]
          %v730 = vld [vmem:[%s1 + $0x6c] sm:$0xf]
          %v731 = vld [vmem:[%s1 + $0x70] sm:$0xf]
          %v732 = vld [vmem:[%s1 + $0x74] sm:$0xf]
          %v733 = vld [vmem:[%s1 + $0x78] sm:$0xf]
          %v734 = vld [vmem:[%s1 + $0x7c] sm:$0xf]
          %v735 = vld [vmem:[%s1 + $0x80] sm:$0xf]
          %v736 = vld [vmem:[%s1 + $0x84] sm:$0xf]
          %v737 = vld [vmem:[%s1 + $0x88] sm:$0xf]
          %v738 = vld [vmem:[%s1 + $0x8c] sm:$0xf]
          %v739 = vld [vmem:[%s1 + $0x90] sm:$0xf]
          %v740 = vld [vmem:[%s1 + $0x94] sm:$0xf]
          %v741 = vld [vmem:[%s1 + $0x98] sm:$0xf]
          %v742 = vld [vmem:[%s1 + $0x9c] sm:$0xf]
          %v743 = vld [vmem:[%s1 + $0xa0] sm:$0xf]
          %v744 = vld [vmem:[%s1 + $0xa4] sm:$0xf]
          %v745 = vld [vmem:[%s1 + $0xa8] sm:$0xf]
          %v746 = vld [vmem:[%s1 + $0xac] sm:$0xf]
          %v747 = vld [vmem:[%s1 + $0xb0] sm:$0xf]
          %v748 = vld [vmem:[%s1 + $0xb4] sm:$0xf]
          %v749 = vld [vmem:[%s1 + $0xb8] sm:$0xf]
          %v750 = vld [vmem:[%s1 + $0xbc] sm:$0xf]
          %v751 = vld [vmem:[%s1 + $0xc0] sm:$0xf]
          %v752 = vld [vmem:[%s1 + $0xc4] sm:$0xf]
          %v753 = vld [vmem:[%s1 + $0xc8] sm:$0xf]
          %v754 = vld [vmem:[%s1 + $0xcc] sm:$0xf]
          %v755 = vld [vmem:[%s1 + $0xd0] sm:$0xf]
          %v756 = vld [vmem:[%s1 + $0xd4] sm:$0xf]
          %v757 = vld [vmem:[%s1 + $0xd8] sm:$0xf]
          %v758 = vld [vmem:[%s1 + $0xdc] sm:$0xf]
          %v759 = vld [vmem:[%s1 + $0xe0] sm:$0xf]
          %v760 = vld [vmem:[%s1 + $0xe4] sm:$0xf]
          %v761 = vld [vmem:[%s1 + $0xe8] sm:$0xf]
          %v762 = vld [vmem:[%s1 + $0xec] sm:$0xf]
          %v763 = vld [vmem:[%s1 + $0xf0] sm:$0xf]
          %v764 = vld [vmem:[%s1 + $0xf4] sm:$0xf]
          %v765 = vld [vmem:[%s1 + $0xf8] sm:$0xf]
          %v766 = vld [vmem:[%s1 + $0xfc] sm:$0xf]
          %v767 = vld [vmem:[%s1 + $0x100] sm:$0xf]
          %v768 = vld [vmem:[%s1 + $0x104] sm:$0xf]
          %v769 = vld [vmem:[%s1 + $0x108] sm:$0xf]
          %v770 = vld [vmem:[%s1 + $0x10c] sm:$0xf]
          %v771 = vld [vmem:[%s1 + $0x110] sm:$0xf]
          %v772 = vld [vmem:[%s1 + $0x114] sm:$0xf]
          %v773 = vld [vmem:[%s1 + $0x118] sm:$0xf]
          %v774 = vld [vmem:[%s1 + $0x11c] sm:$0xf]
          %v775 = vld [vmem:[%s1 + $0x120] sm:$0xf]
          %v776 = vld [vmem:[%s1 + $0x124] sm:$0xf]
          %v777 = vld [vmem:[%s1 + $0x128] sm:$0xf]
          %v778 = vld [vmem:[%s1 + $0x12c] sm:$0xf]
          %v779 = vld [vmem:[%s1 + $0x130] sm:$0xf]
          %v780 = vld [vmem:[%s1 + $0x134] sm:$0xf]
          %v781 = vld [vmem:[%s1 + $0x138] sm:$0xf]
          %v782 = vld [vmem:[%s1 + $0x13c] sm:$0xf]
          %v783 = vld [vmem:[%s1 + $0x140] sm:$0xf]
          %v784 = vld [vmem:[%s1 + $0x144] sm:$0xf]
          %v785 = vld [vmem:[%s1 + $0x148] sm:$0xf]
          %v786 = vld [vmem:[%s1 + $0x14c] sm:$0xf]
          %v787 = vld [vmem:[%s1 + $0x150] sm:$0xf]
          %v788 = vld [vmem:[%s1 + $0x154] sm:$0xf]
          %v789 = vld [vmem:[%s1 + $0x158] sm:$0xf]
          %v790 = vld [vmem:[%s1 + $0x15c] sm:$0xf]
          %v791 = vld [vmem:[%s1 + $0x160] sm:$0xf]
          %v792 = vld [vmem:[%s1 + $0x164] sm:$0xf]
          %v793 = vld [vmem:[%s1 + $0x168] sm:$0xf]
          %v794 = vld [vmem:[%s1 + $0x16c] sm:$0xf]
          %v795 = vld [vmem:[%s1 + $0x170] sm:$0xf]
          %v796 = vld [vmem:[%s1 + $0x174] sm:$0xf]
          %v797 = vld [vmem:[%s1 + $0x178] sm:$0xf]
          %v798 = vld [vmem:[%s1 + $0x17c] sm:$0xf]
          %v799 = vld [vmem:[%s1 + $0x180] sm:$0xf]
          %v800 = vld [vmem:[%s1 + $0x184] sm:$0xf]
          %v801 = vld [vmem:[%s1 + $0x188] sm:$0xf]
          %v802 = vld [vmem:[%s1 + $0x18c] sm:$0xf]
          %v803 = vld [vmem:[%s1 + $0x190] sm:$0xf]
          %v804 = vld [vmem:[%s1 + $0x194] sm:$0xf]
          %v805 = vld [vmem:[%s1 + $0x198] sm:$0xf]
          %v806 = vld [vmem:[%s1 + $0x19c] sm:$0xf]
          %v807 = vld [vmem:[%s1 + $0x1a0] sm:$0xf]
          %v808 = vld [vmem:[%s1 + $0x1a4] sm:$0xf]
          %v809 = vld [vmem:[%s1 + $0x1a8] sm:$0xf]
          %v810 = vld [vmem:[%s1 + $0x1ac] sm:$0xf]
          %v811 = vld [vmem:[%s1 + $0x1b0] sm:$0xf]
          %v812 = vld [vmem:[%s1 + $0x1b4] sm:$0xf]
          %v813 = vld [vmem:[%s1 + $0x1b8] sm:$0xf]
          %v814 = vld [vmem:[%s1 + $0x1bc] sm:$0xf]
          %v815 = vld [vmem:[%s1 + $0x1c0] sm:$0xf]
          %v816 = vld [vmem:[%s1 + $0x1c4] sm:$0xf]
          %v817 = vld [vmem:[%s1 + $0x1c8] sm:$0xf]
          %v818 = vld [vmem:[%s1 + $0x1cc] sm:$0xf]
          %v819 = vld [vmem:[%s1 + $0x1d0] sm:$0xf]
          %v820 = vld [vmem:[%s1 + $0x1d4] sm:$0xf]
          %v821 = vld [vmem:[%s1 + $0x1d8] sm:$0xf]
          %v822 = vld [vmem:[%s1 + $0x1dc] sm:$0xf]
          %v823 = vld [vmem:[%s1 + $0x1e0] sm:$0xf]
          %v824 = vld [vmem:[%s1 + $0x1e4] sm:$0xf]
          %v825 = vld [vmem:[%s1 + $0x1e8] sm:$0xf]
          %v826 = vld [vmem:[%s1 + $0x1ec] sm:$0xf]
          %v827 = vld [vmem:[%s1 + $0x1f0] sm:$0xf]
          %v828 = vld [vmem:[%s1 + $0x1f4] sm:$0xf]
          %v829 = vld [vmem:[%s1 + $0x1f8] sm:$0xf]
          %v830 = vld [vmem:[%s1 + $0x1fc] sm:$0xf]
          %v831 = vld [vmem:[%s1 + $0x200] sm:$0xf]
          %v832 = vld [vmem:[%s1 + $0x204] sm:$0xf]
          %v833 = vld [vmem:[%s1 + $0x208] sm:$0xf]
          %v834 = vld [vmem:[%s1 + $0x20c] sm:$0xf]
          %v835 = vld [vmem:[%s1 + $0x210] sm:$0xf]
          %v836 = vld [vmem:[%s1 + $0x214] sm:$0xf]
          %v837 = vld [vmem:[%s1 + $0x218] sm:$0xf]
          %v838 = vld [vmem:[%s1 + $0x21c] sm:$0xf]
          %v839 = vld [vmem:[%s1 + $0x220] sm:$0xf]
          %v840 = vld [vmem:[%s1 + $0x224] sm:$0xf]
          %v841 = vld [vmem:[%s1 + $0x228] sm:$0xf]
          %v842 = vld [vmem:[%s1 + $0x22c] sm:$0xf]
          %v843 = vld [vmem:[%s1 + $0x230] sm:$0xf]
          %v844 = vld [vmem:[%s1 + $0x234] sm:$0xf]
          %v845 = vld [vmem:[%s1 + $0x238] sm:$0xf]
          %v846 = vld [vmem:[%s1 + $0x23c] sm:$0xf]
          %v847 = vld [vmem:[%s1 + $0x240] sm:$0xf]
          %v848 = vld [vmem:[%s1 + $0x244] sm:$0xf]
          %v849 = vld [vmem:[%s1 + $0x248] sm:$0xf]
          %v850 = vld [vmem:[%s1 + $0x24c] sm:$0xf]
          %v851 = vld [vmem:[%s1 + $0x250] sm:$0xf]
          %v852 = vld [vmem:[%s1 + $0x254] sm:$0xf]
          %v853 = vld [vmem:[%s1 + $0x258] sm:$0xf]
          %v854 = vld [vmem:[%s1 + $0x25c] sm:$0xf]
          %v855 = vld [vmem:[%s1 + $0x260] sm:$0xf]
          %v856 = vld [vmem:[%s1 + $0x264] sm:$0xf]
          %v857 = vld [vmem:[%s1 + $0x268] sm:$0xf]
          %v858 = vld [vmem:[%s1 + $0x26c] sm:$0xf]
          %v859 = vld [vmem:[%s1 + $0x270] sm:$0xf]
          %v860 = vld [vmem:[%s1 + $0x274] sm:$0xf]
          %v861 = vld [vmem:[%s1 + $0x278] sm:$0xf]
          %v862 = vld [vmem:[%s1 + $0x27c] sm:$0xf]
          %v863 = vld [vmem:[%s1 + $0x280] sm:$0xf]
          %v864 = vld [vmem:[%s1 + $0x284] sm:$0xf]
          %v865 = vld [vmem:[%s1 + $0x288] sm:$0xf]
          %v866 = vld [vmem:[%s1 + $0x28c] sm:$0xf]
          %v867 = vld [vmem:[%s1 + $0x290] sm:$0xf]
          %v868 = vld [vmem:[%s1 + $0x294] sm:$0xf]
          %v869 = vld [vmem:[%s1 + $0x298] sm:$0xf]
          %v870 = vld [vmem:[%s1 + $0x29c] sm:$0xf]
          %v871 = vld [vmem:[%s1 + $0x2a0] sm:$0xf]
          %v872 = vld [vmem:[%s1 + $0x2a4] sm:$0xf]
          %v873 = vld [vmem:[%s1 + $0x2a8] sm:$0xf]
          %v874 = vld [vmem:[%s1 + $0x2ac] sm:$0xf]
          %v875 = vld [vmem:[%s1 + $0x2b0] sm:$0xf]
          %v876 = vld [vmem:[%s1 + $0x2b4] sm:$0xf]
          %v877 = vld [vmem:[%s1 + $0x2b8] sm:$0xf]
          %v878 = vld [vmem:[%s1 + $0x2bc] sm:$0xf]
          %v879 = vld [vmem:[%s1 + $0x2c0] sm:$0xf]
          %v880 = vld [vmem:[%s1 + $0x2c4] sm:$0xf]
          %v881 = vld [vmem:[%s1 + $0x2c8] sm:$0xf]
          %v882 = vld [vmem:[%s1 + $0x2cc] sm:$0xf]
          %v883 = vld [vmem:[%s1 + $0x2d0] sm:$0xf]
          %v884 = vld [vmem:[%s1 + $0x2d4] sm:$0xf]
          %v885 = vld [vmem:[%s1 + $0x2d8] sm:$0xf]
          %v886 = vld [vmem:[%s1 + $0x2dc] sm:$0xf]
          %v887 = vld [vmem:[%s1 + $0x2e0] sm:$0xf]
          %v888 = vld [vmem:[%s1 + $0x2e4] sm:$0xf]
          %v889 = vld [vmem:[%s1 + $0x2e8] sm:$0xf]
          %v890 = vld [vmem:[%s1 + $0x2ec] sm:$0xf]
          %v891 = vld [vmem:[%s1 + $0x2f0] sm:$0xf]
          %v892 = vld [vmem:[%s1 + $0x2f4] sm:$0xf]
          %v893 = vld [vmem:[%s1 + $0x2f8] sm:$0xf]
          %v894 = vld [vmem:[%s1 + $0x2fc] sm:$0xf]
          %v895 = vld [vmem:[%s1 + $0x300] sm:$0xf]
          %v896 = vld [vmem:[%s1 + $0x304] sm:$0xf]
          %v897 = vld [vmem:[%s1 + $0x308] sm:$0xf]
          %v898 = vld [vmem:[%s1 + $0x30c] sm:$0xf]
          %v899 = vld [vmem:[%s1 + $0x310] sm:$0xf]
          %v900 = vld [vmem:[%s1 + $0x314] sm:$0xf]
          %v901 = vld [vmem:[%s1 + $0x318] sm:$0xf]
          %v902 = vld [vmem:[%s1 + $0x31c] sm:$0xf]
          %v903 = vld [vmem:[%s1 + $0x320] sm:$0xf]
          %v904 = vld [vmem:[%s1 + $0x324] sm:$0xf]
          %v905 = vld [vmem:[%s1 + $0x328] sm:$0xf]
          %v906 = vld [vmem:[%s1 + $0x32c] sm:$0xf]
          %v907 = vld [vmem:[%s1 + $0x330] sm:$0xf]
          %v908 = vld [vmem:[%s1 + $0x334] sm:$0xf]
          %v909 = vld [vmem:[%s1 + $0x338] sm:$0xf]
          %v910 = vld [vmem:[%s1 + $0x33c] sm:$0xf]
          %v911 = vld [vmem:[%s1 + $0x340] sm:$0xf]
          %v912 = vld [vmem:[%s1 + $0x344] sm:$0xf]
          %v913 = vld [vmem:[%s1 + $0x348] sm:$0xf]
          %v914 = vld [vmem:[%s1 + $0x34c] sm:$0xf]
          %v915 = vld [vmem:[%s1 + $0x350] sm:$0xf]
          %v916 = vld [vmem:[%s1 + $0x354] sm:$0xf]
          %v917 = vld [vmem:[%s1 + $0x358] sm:$0xf]
          %v918 = vld [vmem:[%s1 + $0x35c] sm:$0xf]
          %v919 = vld [vmem:[%s1 + $0x360] sm:$0xf]
          %v920 = vld [vmem:[%s1 + $0x364] sm:$0xf]
          %v921 = vld [vmem:[%s1 + $0x368] sm:$0xf]
          %v922 = vld [vmem:[%s1 + $0x36c] sm:$0xf]
          %v923 = vld [vmem:[%s1 + $0x370] sm:$0xf]
          %v924 = vld [vmem:[%s1 + $0x374] sm:$0xf]
          %v925 = vld [vmem:[%s1 + $0x378] sm:$0xf]
          %v926 = vld [vmem:[%s1 + $0x37c] sm:$0xf]
          %v927 = vld [vmem:[#allocation6] sm:$0x1]
          %v929 = vlaneseq
          %v930 = vshrl.u32 %v929, 7
          %v931 = vsub.s32 0, %v930
          %v932 = vrot.slane %v927, %v931
          %933 = vset.pattern.permute.xlu0 0
          %934 = vperm.xlu0 %933, %v932
          %v935 = vpop.permute.xlu0 %934
          %v1161 = vunpack.c.l.b16 %v703
          %v1162 = vunpack.c.l.b16 %v704
          %v1163 = vunpack.c.l.b16 %v705
          %v1164 = vunpack.c.l.b16 %v706
          %v1165 = vunpack.c.l.b16 %v707
          %v1166 = vunpack.c.l.b16 %v708
          %v1167 = vunpack.c.l.b16 %v709
          %v1168 = vunpack.c.l.b16 %v710
          %v1169 = vunpack.c.l.b16 %v711
          %v1170 = vunpack.c.l.b16 %v712
          %v1171 = vunpack.c.l.b16 %v713
          %v1172 = vunpack.c.l.b16 %v714
          %v1173 = vunpack.c.l.b16 %v715
          %v1174 = vunpack.c.l.b16 %v716
          %v1175 = vunpack.c.l.b16 %v717
          %v1176 = vunpack.c.l.b16 %v718
          %v1177 = vunpack.c.l.b16 %v719
          %v1178 = vunpack.c.l.b16 %v720
          %v1179 = vunpack.c.l.b16 %v721
          %v1180 = vunpack.c.l.b16 %v722
          %v1181 = vunpack.c.l.b16 %v723
          %v1182 = vunpack.c.l.b16 %v724
          %v1183 = vunpack.c.l.b16 %v725
          %v1184 = vunpack.c.l.b16 %v726
          %v1185 = vunpack.c.l.b16 %v727
          %v1186 = vunpack.c.l.b16 %v728
          %v1187 = vunpack.c.l.b16 %v729
          %v1188 = vunpack.c.l.b16 %v730
          %v1189 = vunpack.c.l.b16 %v731
          %v1190 = vunpack.c.l.b16 %v732
          %v1191 = vunpack.c.l.b16 %v733
          %v1192 = vunpack.c.l.b16 %v734
          %v1193 = vunpack.c.l.b16 %v735
          %v1194 = vunpack.c.l.b16 %v736
          %v1195 = vunpack.c.l.b16 %v737
          %v1196 = vunpack.c.l.b16 %v738
          %v1197 = vunpack.c.l.b16 %v739
          %v1198 = vunpack.c.l.b16 %v740
          %v1199 = vunpack.c.l.b16 %v741
          %v1200 = vunpack.c.l.b16 %v742
          %v1201 = vunpack.c.l.b16 %v743
          %v1202 = vunpack.c.l.b16 %v744
          %v1203 = vunpack.c.l.b16 %v745
          %v1204 = vunpack.c.l.b16 %v746
          %v1205 = vunpack.c.l.b16 %v747
          %v1206 = vunpack.c.l.b16 %v748
          %v1207 = vunpack.c.l.b16 %v749
          %v1208 = vunpack.c.l.b16 %v750
          %v1209 = vunpack.c.l.b16 %v751
          %v1210 = vunpack.c.l.b16 %v752
          %v1211 = vunpack.c.l.b16 %v753
          %v1212 = vunpack.c.l.b16 %v754
          %v1213 = vunpack.c.l.b16 %v755
          %v1214 = vunpack.c.l.b16 %v756
          %v1215 = vunpack.c.l.b16 %v757
          %v1216 = vunpack.c.l.b16 %v758
          %v1217 = vunpack.c.l.b16 %v759
          %v1218 = vunpack.c.l.b16 %v760
          %v1219 = vunpack.c.l.b16 %v761
          %v1220 = vunpack.c.l.b16 %v762
          %v1221 = vunpack.c.l.b16 %v763
          %v1222 = vunpack.c.l.b16 %v764
          %v1223 = vunpack.c.l.b16 %v765
          %v1224 = vunpack.c.l.b16 %v766
          %v1225 = vunpack.c.l.b16 %v767
          %v1226 = vunpack.c.l.b16 %v768
          %v1227 = vunpack.c.l.b16 %v769
          %v1228 = vunpack.c.l.b16 %v770
          %v1229 = vunpack.c.l.b16 %v771
          %v1230 = vunpack.c.l.b16 %v772
          %v1231 = vunpack.c.l.b16 %v773
          %v1232 = vunpack.c.l.b16 %v774
          %v1233 = vunpack.c.l.b16 %v775
          %v1234 = vunpack.c.l.b16 %v776
          %v1235 = vunpack.c.l.b16 %v777
          %v1236 = vunpack.c.l.b16 %v778
          %v1237 = vunpack.c.l.b16 %v779
          %v1238 = vunpack.c.l.b16 %v780
          %v1239 = vunpack.c.l.b16 %v781
          %v1240 = vunpack.c.l.b16 %v782
          %v1241 = vunpack.c.l.b16 %v783
          %v1242 = vunpack.c.l.b16 %v784
          %v1243 = vunpack.c.l.b16 %v785
          %v1244 = vunpack.c.l.b16 %v786
          %v1245 = vunpack.c.l.b16 %v787
          %v1246 = vunpack.c.l.b16 %v788
          %v1247 = vunpack.c.l.b16 %v789
          %v1248 = vunpack.c.l.b16 %v790
          %v1249 = vunpack.c.l.b16 %v791
          %v1250 = vunpack.c.l.b16 %v792
          %v1251 = vunpack.c.l.b16 %v793
          %v1252 = vunpack.c.l.b16 %v794
          %v1253 = vunpack.c.l.b16 %v795
          %v1254 = vunpack.c.l.b16 %v796
          %v1255 = vunpack.c.l.b16 %v797
          %v1256 = vunpack.c.l.b16 %v798
          %v1257 = vunpack.c.l.b16 %v799
          %v1258 = vunpack.c.l.b16 %v800
          %v1259 = vunpack.c.l.b16 %v801
          %v1260 = vunpack.c.l.b16 %v802
          %v1261 = vunpack.c.l.b16 %v803
          %v1262 = vunpack.c.l.b16 %v804
          %v1263 = vunpack.c.l.b16 %v805
          %v1264 = vunpack.c.l.b16 %v806
          %v1265 = vunpack.c.l.b16 %v807
          %v1266 = vunpack.c.l.b16 %v808
          %v1267 = vunpack.c.l.b16 %v809
          %v1268 = vunpack.c.l.b16 %v810
          %v1269 = vunpack.c.l.b16 %v811
          %v1270 = vunpack.c.l.b16 %v812
          %v1271 = vunpack.c.l.b16 %v813
          %v1272 = vunpack.c.l.b16 %v814
          %v1273 = vunpack.c.l.b16 %v815
          %v1274 = vunpack.c.l.b16 %v816
          %v1275 = vunpack.c.l.b16 %v817
          %v1276 = vunpack.c.l.b16 %v818
          %v1277 = vunpack.c.l.b16 %v819
          %v1278 = vunpack.c.l.b16 %v820
          %v1279 = vunpack.c.l.b16 %v821
          %v1280 = vunpack.c.l.b16 %v822
          %v1281 = vunpack.c.l.b16 %v823
          %v1282 = vunpack.c.l.b16 %v824
          %v1283 = vunpack.c.l.b16 %v825
          %v1284 = vunpack.c.l.b16 %v826
          %v1285 = vunpack.c.l.b16 %v827
          %v1286 = vunpack.c.l.b16 %v828
          %v1287 = vunpack.c.l.b16 %v829
          %v1288 = vunpack.c.l.b16 %v830
          %v1289 = vunpack.c.l.b16 %v831
          %v1290 = vunpack.c.l.b16 %v832
          %v1291 = vunpack.c.l.b16 %v833
          %v1292 = vunpack.c.l.b16 %v834
          %v1293 = vunpack.c.l.b16 %v835
          %v1294 = vunpack.c.l.b16 %v836
          %v1295 = vunpack.c.l.b16 %v837
          %v1296 = vunpack.c.l.b16 %v838
          %v1297 = vunpack.c.l.b16 %v839
          %v1298 = vunpack.c.l.b16 %v840
          %v1299 = vunpack.c.l.b16 %v841
          %v1300 = vunpack.c.l.b16 %v842
          %v1301 = vunpack.c.l.b16 %v843
          %v1302 = vunpack.c.l.b16 %v844
          %v1303 = vunpack.c.l.b16 %v845
          %v1304 = vunpack.c.l.b16 %v846
          %v1305 = vunpack.c.l.b16 %v847
          %v1306 = vunpack.c.l.b16 %v848
          %v1307 = vunpack.c.l.b16 %v849
          %v1308 = vunpack.c.l.b16 %v850
          %v1309 = vunpack.c.l.b16 %v851
          %v1310 = vunpack.c.l.b16 %v852
          %v1311 = vunpack.c.l.b16 %v853
          %v1312 = vunpack.c.l.b16 %v854
          %v1313 = vunpack.c.l.b16 %v855
          %v1314 = vunpack.c.l.b16 %v856
          %v1315 = vunpack.c.l.b16 %v857
          %v1316 = vunpack.c.l.b16 %v858
          %v1317 = vunpack.c.l.b16 %v859
          %v1318 = vunpack.c.l.b16 %v860
          %v1319 = vunpack.c.l.b16 %v861
          %v1320 = vunpack.c.l.b16 %v862
          %v1321 = vunpack.c.l.b16 %v863
          %v1322 = vunpack.c.l.b16 %v864
          %v1323 = vunpack.c.l.b16 %v865
          %v1324 = vunpack.c.l.b16 %v866
          %v1325 = vunpack.c.l.b16 %v867
          %v1326 = vunpack.c.l.b16 %v868
          %v1327 = vunpack.c.l.b16 %v869
          %v1328 = vunpack.c.l.b16 %v870
          %v1329 = vunpack.c.l.b16 %v871
          %v1330 = vunpack.c.l.b16 %v872
          %v1331 = vunpack.c.l.b16 %v873
          %v1332 = vunpack.c.l.b16 %v874
          %v1333 = vunpack.c.l.b16 %v875
          %v1334 = vunpack.c.l.b16 %v876
          %v1335 = vunpack.c.l.b16 %v877
          %v1336 = vunpack.c.l.b16 %v878
          %v1337 = vunpack.c.l.b16 %v879
          %v1338 = vunpack.c.l.b16 %v880
          %v1339 = vunpack.c.l.b16 %v881
          %v1340 = vunpack.c.l.b16 %v882
          %v1341 = vunpack.c.l.b16 %v883
          %v1342 = vunpack.c.l.b16 %v884
          %v1343 = vunpack.c.l.b16 %v885
          %v1344 = vunpack.c.l.b16 %v886
          %v1345 = vunpack.c.l.b16 %v887
          %v1346 = vunpack.c.l.b16 %v888
          %v1347 = vunpack.c.l.b16 %v889
          %v1348 = vunpack.c.l.b16 %v890
          %v1349 = vunpack.c.l.b16 %v891
          %v1350 = vunpack.c.l.b16 %v892
          %v1351 = vunpack.c.l.b16 %v893
          %v1352 = vunpack.c.l.b16 %v894
          %v1353 = vunpack.c.l.b16 %v895
          %v1354 = vunpack.c.l.b16 %v896
          %v1355 = vunpack.c.l.b16 %v897
          %v1356 = vunpack.c.l.b16 %v898
          %v1357 = vunpack.c.l.b16 %v899
          %v1358 = vunpack.c.l.b16 %v900
          %v1359 = vunpack.c.l.b16 %v901
          %v1360 = vunpack.c.l.b16 %v902
          %v1361 = vunpack.c.l.b16 %v903
          %v1362 = vunpack.c.l.b16 %v904
          %v1363 = vunpack.c.l.b16 %v905
          %v1364 = vunpack.c.l.b16 %v906
          %v1365 = vunpack.c.l.b16 %v907
          %v1366 = vunpack.c.l.b16 %v908
          %v1367 = vunpack.c.l.b16 %v909
          %v1368 = vunpack.c.l.b16 %v910
          %v1369 = vunpack.c.l.b16 %v911
          %v1370 = vunpack.c.l.b16 %v912
          %v1371 = vunpack.c.l.b16 %v913
          %v1372 = vunpack.c.l.b16 %v914
          %v1373 = vunpack.c.l.b16 %v915
          %v1374 = vunpack.c.l.b16 %v916
          %v1375 = vunpack.c.l.b16 %v917
          %v1376 = vunpack.c.l.b16 %v918
          %v1377 = vunpack.c.l.b16 %v919
          %v1378 = vunpack.c.l.b16 %v920
          %v1379 = vunpack.c.l.b16 %v921
          %v1380 = vunpack.c.l.b16 %v922
          %v1381 = vunpack.c.l.b16 %v923
          %v1382 = vunpack.c.l.b16 %v924
          %v1383 = vunpack.c.l.b16 %v925
          %v1384 = vunpack.c.l.b16 %v926
          %v1385 = vpack.c.b16 %v1162, %v1161
          %v1386 = vpack.c.b16 %v1164, %v1163
          %v1387 = vpack.c.b16 %v1166, %v1165
          %v1388 = vpack.c.b16 %v1168, %v1167
          %v1389 = vpack.c.b16 %v1170, %v1169
          %v1390 = vpack.c.b16 %v1172, %v1171
          %v1391 = vpack.c.b16 %v1174, %v1173
          %v1392 = vpack.c.b16 %v1176, %v1175
          %v1393 = vpack.c.b16 %v1178, %v1177
          %v1394 = vpack.c.b16 %v1180, %v1179
          %v1395 = vpack.c.b16 %v1182, %v1181
          %v1396 = vpack.c.b16 %v1184, %v1183
          %v1397 = vpack.c.b16 %v1186, %v1185
          %v1398 = vpack.c.b16 %v1188, %v1187
          %v1399 = vpack.c.b16 %v1190, %v1189
          %v1400 = vpack.c.b16 %v1192, %v1191
          %v1401 = vpack.c.b16 %v1194, %v1193
          %v1402 = vpack.c.b16 %v1196, %v1195
          %v1403 = vpack.c.b16 %v1198, %v1197
          %v1404 = vpack.c.b16 %v1200, %v1199
          %v1405 = vpack.c.b16 %v1202, %v1201
          %v1406 = vpack.c.b16 %v1204, %v1203
          %v1407 = vpack.c.b16 %v1206, %v1205
          %v1408 = vpack.c.b16 %v1208, %v1207
          %v1409 = vpack.c.b16 %v1210, %v1209
          %v1410 = vpack.c.b16 %v1212, %v1211
          %v1411 = vpack.c.b16 %v1214, %v1213
          %v1412 = vpack.c.b16 %v1216, %v1215
          %v1413 = vpack.c.b16 %v1218, %v1217
          %v1414 = vpack.c.b16 %v1220, %v1219
          %v1415 = vpack.c.b16 %v1222, %v1221
          %v1416 = vpack.c.b16 %v1224, %v1223
          %v1417 = vpack.c.b16 %v1226, %v1225
          %v1418 = vpack.c.b16 %v1228, %v1227
          %v1419 = vpack.c.b16 %v1230, %v1229
          %v1420 = vpack.c.b16 %v1232, %v1231
          %v1421 = vpack.c.b16 %v1234, %v1233
          %v1422 = vpack.c.b16 %v1236, %v1235
          %v1423 = vpack.c.b16 %v1238, %v1237
          %v1424 = vpack.c.b16 %v1240, %v1239
          %v1425 = vpack.c.b16 %v1242, %v1241
          %v1426 = vpack.c.b16 %v1244, %v1243
          %v1427 = vpack.c.b16 %v1246, %v1245
          %v1428 = vpack.c.b16 %v1248, %v1247
          %v1429 = vpack.c.b16 %v1250, %v1249
          %v1430 = vpack.c.b16 %v1252, %v1251
          %v1431 = vpack.c.b16 %v1254, %v1253
          %v1432 = vpack.c.b16 %v1256, %v1255
          %v1433 = vpack.c.b16 %v1258, %v1257
          %v1434 = vpack.c.b16 %v1260, %v1259
          %v1435 = vpack.c.b16 %v1262, %v1261
          %v1436 = vpack.c.b16 %v1264, %v1263
          %v1437 = vpack.c.b16 %v1266, %v1265
          %v1438 = vpack.c.b16 %v1268, %v1267
          %v1439 = vpack.c.b16 %v1270, %v1269
          %v1440 = vpack.c.b16 %v1272, %v1271
          %v1441 = vpack.c.b16 %v1274, %v1273
          %v1442 = vpack.c.b16 %v1276, %v1275
          %v1443 = vpack.c.b16 %v1278, %v1277
          %v1444 = vpack.c.b16 %v1280, %v1279
          %v1445 = vpack.c.b16 %v1282, %v1281
          %v1446 = vpack.c.b16 %v1284, %v1283
          %v1447 = vpack.c.b16 %v1286, %v1285
          %v1448 = vpack.c.b16 %v1288, %v1287
          %v1449 = vpack.c.b16 %v1290, %v1289
          %v1450 = vpack.c.b16 %v1292, %v1291
          %v1451 = vpack.c.b16 %v1294, %v1293
          %v1452 = vpack.c.b16 %v1296, %v1295
          %v1453 = vpack.c.b16 %v1298, %v1297
          %v1454 = vpack.c.b16 %v1300, %v1299
          %v1455 = vpack.c.b16 %v1302, %v1301
          %v1456 = vpack.c.b16 %v1304, %v1303
          %v1457 = vpack.c.b16 %v1306, %v1305
          %v1458 = vpack.c.b16 %v1308, %v1307
          %v1459 = vpack.c.b16 %v1310, %v1309
          %v1460 = vpack.c.b16 %v1312, %v1311
          %v1461 = vpack.c.b16 %v1314, %v1313
          %v1462 = vpack.c.b16 %v1316, %v1315
          %v1463 = vpack.c.b16 %v1318, %v1317
          %v1464 = vpack.c.b16 %v1320, %v1319
          %v1465 = vpack.c.b16 %v1322, %v1321
          %v1466 = vpack.c.b16 %v1324, %v1323
          %v1467 = vpack.c.b16 %v1326, %v1325
          %v1468 = vpack.c.b16 %v1328, %v1327
          %v1469 = vpack.c.b16 %v1330, %v1329
          %v1470 = vpack.c.b16 %v1332, %v1331
          %v1471 = vpack.c.b16 %v1334, %v1333
          %v1472 = vpack.c.b16 %v1336, %v1335
          %v1473 = vpack.c.b16 %v1338, %v1337
          %v1474 = vpack.c.b16 %v1340, %v1339
          %v1475 = vpack.c.b16 %v1342, %v1341
          %v1476 = vpack.c.b16 %v1344, %v1343
          %v1477 = vpack.c.b16 %v1346, %v1345
          %v1478 = vpack.c.b16 %v1348, %v1347
          %v1479 = vpack.c.b16 %v1350, %v1349
          %v1480 = vpack.c.b16 %v1352, %v1351
          %v1481 = vpack.c.b16 %v1354, %v1353
          %v1482 = vpack.c.b16 %v1356, %v1355
          %v1483 = vpack.c.b16 %v1358, %v1357
          %v1484 = vpack.c.b16 %v1360, %v1359
          %v1485 = vpack.c.b16 %v1362, %v1361
          %v1486 = vpack.c.b16 %v1364, %v1363
          %v1487 = vpack.c.b16 %v1366, %v1365
          %v1488 = vpack.c.b16 %v1368, %v1367
          %v1489 = vpack.c.b16 %v1370, %v1369
          %v1490 = vpack.c.b16 %v1372, %v1371
          %v1491 = vpack.c.b16 %v1374, %v1373
          %v1492 = vpack.c.b16 %v1376, %v1375
          %v1493 = vpack.c.b16 %v1378, %v1377
          %v1494 = vpack.c.b16 %v1380, %v1379
          %v1495 = vpack.c.b16 %v1382, %v1381
          %v1496 = vpack.c.b16 %v1384, %v1383
          %1609 = vmatprep.subr.bf16.mxu0 0
          %1610 = vmatpush1.bf16.msra.mxu0 %v1385
          %1611 = vmatprep.subr.bf16.mxu0 0
          %1612 = vmatpush1.bf16.msra.mxu0 %v1386
          %1613 = vmatprep.subr.bf16.mxu0 0
          %1614 = vmatpush1.bf16.msra.mxu0 %v1387
          %1615 = vmatprep.subr.bf16.mxu0 0
          %1616 = vmatpush1.bf16.msra.mxu0 %v1388
          %1617 = vmatprep.subr.bf16.mxu0 0
          %1618 = vmatpush1.bf16.msra.mxu0 %v1389
          %1619 = vmatprep.subr.bf16.mxu0 0
          %1620 = vmatpush1.bf16.msra.mxu0 %v1390
          %1621 = vmatprep.subr.bf16.mxu0 0
          %1622 = vmatpush1.bf16.msra.mxu0 %v1391
          %1623 = vmatprep.subr.bf16.mxu0 0
          %1624 = vmatpush1.bf16.msra.mxu0 %v1392
          %1625 = vmatprep.subr.bf16.mxu0 0
          %1626 = vmatpush1.bf16.msra.mxu0 %v1393
          %1627 = vmatprep.subr.bf16.mxu0 0
          %1628 = vmatpush1.bf16.msra.mxu0 %v1394
          %1629 = vmatprep.subr.bf16.mxu0 0
          %1630 = vmatpush1.bf16.msra.mxu0 %v1395
          %1631 = vmatprep.subr.bf16.mxu0 0
          %1632 = vmatpush1.bf16.msra.mxu0 %v1396
          %1633 = vmatprep.subr.bf16.mxu0 0
          %1634 = vmatpush1.bf16.msra.mxu0 %v1397
          %1635 = vmatprep.subr.bf16.mxu0 0
          %1636 = vmatpush1.bf16.msra.mxu0 %v1398
          %1637 = vmatprep.subr.bf16.mxu0 0
          %1638 = vmatpush1.bf16.msra.mxu0 %v1399
          %1639 = vmatprep.subr.bf16.mxu0 0
          %1640 = vmatpush1.bf16.msra.mxu0 %v1400
          %1641 = vmatprep.mubr.bf16.mxu0 %v690
          %1642 = vmatmul.mubr.bf16.gmra.mrb[0].mxu0 %v689
          %v1643 = vpop.f32.mrb[0].mxu0
          %v1644 = vadd.f32 %v935, %v1643
          %v1645 = vpop.f32.mrb[0].mxu0
          %v1646 = vpop.f32.mrb[0].mxu0
          %v1647 = vadd.f32 %v935, %v1646
          %v1648 = vpop.f32.mrb[0].mxu0
          %1649 = vdwg.mxu0
          %1650 = vmatprep.subr.bf16.mxu0 0
          %1651 = vmatpush1.bf16.msra.mxu0 %v1401
          %1652 = vmatprep.subr.bf16.mxu0 0
          %1653 = vmatpush1.bf16.msra.mxu0 %v1402
          %1654 = vmatprep.subr.bf16.mxu0 0
          %1655 = vmatpush1.bf16.msra.mxu0 %v1403
          %1656 = vmatprep.subr.bf16.mxu0 0
          %1657 = vmatpush1.bf16.msra.mxu0 %v1404
          %1658 = vmatprep.subr.bf16.mxu0 0
          %1659 = vmatpush1.bf16.msra.mxu0 %v1405
          %1660 = vmatprep.subr.bf16.mxu0 0
          %1661 = vmatpush1.bf16.msra.mxu0 %v1406
          %1662 = vmatprep.subr.bf16.mxu0 0
          %1663 = vmatpush1.bf16.msra.mxu0 %v1407
          %1664 = vmatprep.subr.bf16.mxu0 0
          %1665 = vmatpush1.bf16.msra.mxu0 %v1408
          %1666 = vmatprep.subr.bf16.mxu0 0
          %1667 = vmatpush1.bf16.msra.mxu0 %v1409
          %1668 = vmatprep.subr.bf16.mxu0 0
          %1669 = vmatpush1.bf16.msra.mxu0 %v1410
          %1670 = vmatprep.subr.bf16.mxu0 0
          %1671 = vmatpush1.bf16.msra.mxu0 %v1411
          %1672 = vmatprep.subr.bf16.mxu0 0
          %1673 = vmatpush1.bf16.msra.mxu0 %v1412
          %1674 = vmatprep.subr.bf16.mxu0 0
          %1675 = vmatpush1.bf16.msra.mxu0 %v1413
          %1676 = vmatprep.subr.bf16.mxu0 0
          %1677 = vmatpush1.bf16.msra.mxu0 %v1414
          %1678 = vmatprep.subr.bf16.mxu0 0
          %1679 = vmatpush1.bf16.msra.mxu0 %v1415
          %1680 = vmatprep.subr.bf16.mxu0 0
          %1681 = vmatpush1.bf16.msra.mxu0 %v1416
          %1682 = vmatprep.mubr.bf16.mxu0 %v692
          %1683 = vmatmul.mubr.bf16.gmra.mrb[0].mxu0 %v691
          %v1684 = vpop.f32.mrb[0].mxu0
          %v1685 = vadd.f32 %v1644, %v1684
          %v1686 = vpop.f32.mrb[0].mxu0
          %v1687 = vpop.f32.mrb[0].mxu0
          %v1688 = vadd.f32 %v1647, %v1687
          %v1689 = vpop.f32.mrb[0].mxu0
          %1690 = vdwg.mxu0
          %1691 = vmatprep.subr.bf16.mxu0 0
          %1692 = vmatpush1.bf16.msra.mxu0 %v1417
          %1693 = vmatprep.subr.bf16.mxu0 0
          %1694 = vmatpush1.bf16.msra.mxu0 %v1418
          %1695 = vmatprep.subr.bf16.mxu0 0
          %1696 = vmatpush1.bf16.msra.mxu0 %v1419
          %1697 = vmatprep.subr.bf16.mxu0 0
          %1698 = vmatpush1.bf16.msra.mxu0 %v1420
          %1699 = vmatprep.subr.bf16.mxu0 0
          %1700 = vmatpush1.bf16.msra.mxu0 %v1421
          %1701 = vmatprep.subr.bf16.mxu0 0
          %1702 = vmatpush1.bf16.msra.mxu0 %v1422
          %1703 = vmatprep.subr.bf16.mxu0 0
          %1704 = vmatpush1.bf16.msra.mxu0 %v1423
          %1705 = vmatprep.subr.bf16.mxu0 0
          %1706 = vmatpush1.bf16.msra.mxu0 %v1424
          %1707 = vmatprep.subr.bf16.mxu0 0
          %1708 = vmatpush1.bf16.msra.mxu0 %v1425
          %1709 = vmatprep.subr.bf16.mxu0 0
          %1710 = vmatpush1.bf16.msra.mxu0 %v1426
          %1711 = vmatprep.subr.bf16.mxu0 0
          %1712 = vmatpush1.bf16.msra.mxu0 %v1427
          %1713 = vmatprep.subr.bf16.mxu0 0
          %1714 = vmatpush1.bf16.msra.mxu0 %v1428
          %1715 = vmatprep.subr.bf16.mxu0 0
          %1716 = vmatpush1.bf16.msra.mxu0 %v1429
          %1717 = vmatprep.subr.bf16.mxu0 0
          %1718 = vmatpush1.bf16.msra.mxu0 %v1430
          %1719 = vmatprep.subr.bf16.mxu0 0
          %1720 = vmatpush1.bf16.msra.mxu0 %v1431
          %1721 = vmatprep.subr.bf16.mxu0 0
          %1722 = vmatpush1.bf16.msra.mxu0 %v1432
          %1723 = vmatprep.mubr.bf16.mxu0 %v694
          %1724 = vmatmul.mubr.bf16.gmra.mrb[0].mxu0 %v693
          %v1725 = vpop.f32.mrb[0].mxu0
          %v1726 = vadd.f32 %v1685, %v1725
          %v1727 = vpop.f32.mrb[0].mxu0
          %v1728 = vpop.f32.mrb[0].mxu0
          %v1729 = vadd.f32 %v1688, %v1728
          %v1730 = vpop.f32.mrb[0].mxu0
          %1731 = vdwg.mxu0
          %1732 = vmatprep.subr.bf16.mxu0 0
          %1733 = vmatpush1.bf16.msra.mxu0 %v1433
          %1734 = vmatprep.subr.bf16.mxu0 0
          %1735 = vmatpush1.bf16.msra.mxu0 %v1434
          %1736 = vmatprep.subr.bf16.mxu0 0
          %1737 = vmatpush1.bf16.msra.mxu0 %v1435
          %1738 = vmatprep.subr.bf16.mxu0 0
          %1739 = vmatpush1.bf16.msra.mxu0 %v1436
          %1740 = vmatprep.subr.bf16.mxu0 0
          %1741 = vmatpush1.bf16.msra.mxu0 %v1437
          %1742 = vmatprep.subr.bf16.mxu0 0
          %1743 = vmatpush1.bf16.msra.mxu0 %v1438
          %1744 = vmatprep.subr.bf16.mxu0 0
          %1745 = vmatpush1.bf16.msra.mxu0 %v1439
          %1746 = vmatprep.subr.bf16.mxu0 0
          %1747 = vmatpush1.bf16.msra.mxu0 %v1440
          %1748 = vmatprep.subr.bf16.mxu0 0
          %1749 = vmatpush1.bf16.msra.mxu0 %v1441
          %1750 = vmatprep.subr.bf16.mxu0 0
          %1751 = vmatpush1.bf16.msra.mxu0 %v1442
          %1752 = vmatprep.subr.bf16.mxu0 0
          %1753 = vmatpush1.bf16.msra.mxu0 %v1443
          %1754 = vmatprep.subr.bf16.mxu0 0
          %1755 = vmatpush1.bf16.msra.mxu0 %v1444
          %1756 = vmatprep.subr.bf16.mxu0 0
          %1757 = vmatpush1.bf16.msra.mxu0 %v1445
          %1758 = vmatprep.subr.bf16.mxu0 0
          %1759 = vmatpush1.bf16.msra.mxu0 %v1446
          %1760 = vmatprep.subr.bf16.mxu0 0
          %1761 = vmatpush1.bf16.msra.mxu0 %v1447
          %1762 = vmatprep.subr.bf16.mxu0 0
          %1763 = vmatpush1.bf16.msra.mxu0 %v1448
          %1764 = vmatprep.mubr.bf16.mxu0 %v696
          %1765 = vmatmul.mubr.bf16.gmra.mrb[0].mxu0 %v695
          %v1766 = vpop.f32.mrb[0].mxu0
          %v1767 = vadd.f32 %v1726, %v1766
          %v1768 = vpop.f32.mrb[0].mxu0
          %v1769 = vpop.f32.mrb[0].mxu0
          %v1770 = vadd.f32 %v1729, %v1769
          %v1771 = vpop.f32.mrb[0].mxu0
          %1772 = vdwg.mxu0
          %1773 = vmatprep.subr.bf16.mxu0 0
          %1774 = vmatpush1.bf16.msra.mxu0 %v1449
          %1775 = vmatprep.subr.bf16.mxu0 0
          %1776 = vmatpush1.bf16.msra.mxu0 %v1450
          %1777 = vmatprep.subr.bf16.mxu0 0
          %1778 = vmatpush1.bf16.msra.mxu0 %v1451
          %1779 = vmatprep.subr.bf16.mxu0 0
          %1780 = vmatpush1.bf16.msra.mxu0 %v1452
          %1781 = vmatprep.subr.bf16.mxu0 0
          %1782 = vmatpush1.bf16.msra.mxu0 %v1453
          %1783 = vmatprep.subr.bf16.mxu0 0
          %1784 = vmatpush1.bf16.msra.mxu0 %v1454
          %1785 = vmatprep.subr.bf16.mxu0 0
          %1786 = vmatpush1.bf16.msra.mxu0 %v1455
          %1787 = vmatprep.subr.bf16.mxu0 0
          %1788 = vmatpush1.bf16.msra.mxu0 %v1456
          %1789 = vmatprep.subr.bf16.mxu0 0
          %1790 = vmatpush1.bf16.msra.mxu0 %v1457
          %1791 = vmatprep.subr.bf16.mxu0 0
          %1792 = vmatpush1.bf16.msra.mxu0 %v1458
          %1793 = vmatprep.subr.bf16.mxu0 0
          %1794 = vmatpush1.bf16.msra.mxu0 %v1459
          %1795 = vmatprep.subr.bf16.mxu0 0
          %1796 = vmatpush1.bf16.msra.mxu0 %v1460
          %1797 = vmatprep.subr.bf16.mxu0 0
          %1798 = vmatpush1.bf16.msra.mxu0 %v1461
          %1799 = vmatprep.subr.bf16.mxu0 0
          %1800 = vmatpush1.bf16.msra.mxu0 %v1462
          %1801 = vmatprep.subr.bf16.mxu0 0
          %1802 = vmatpush1.bf16.msra.mxu0 %v1463
          %1803 = vmatprep.subr.bf16.mxu0 0
          %1804 = vmatpush1.bf16.msra.mxu0 %v1464
          %1805 = vmatprep.mubr.bf16.mxu0 %v698
          %1806 = vmatmul.mubr.bf16.gmra.mrb[0].mxu0 %v697
          %v1807 = vpop.f32.mrb[0].mxu0
          %v1808 = vadd.f32 %v1767, %v1807
          %v1809 = vpop.f32.mrb[0].mxu0
          %v1810 = vpop.f32.mrb[0].mxu0
          %v1811 = vadd.f32 %v1770, %v1810
          %v1812 = vpop.f32.mrb[0].mxu0
          %1813 = vdwg.mxu0
          %1814 = vmatprep.subr.bf16.mxu0 0
          %1815 = vmatpush1.bf16.msra.mxu0 %v1465
          %1816 = vmatprep.subr.bf16.mxu0 0
          %1817 = vmatpush1.bf16.msra.mxu0 %v1466
          %1818 = vmatprep.subr.bf16.mxu0 0
          %1819 = vmatpush1.bf16.msra.mxu0 %v1467
          %1820 = vmatprep.subr.bf16.mxu0 0
          %1821 = vmatpush1.bf16.msra.mxu0 %v1468
          %1822 = vmatprep.subr.bf16.mxu0 0
          %1823 = vmatpush1.bf16.msra.mxu0 %v1469
          %1824 = vmatprep.subr.bf16.mxu0 0
          %1825 = vmatpush1.bf16.msra.mxu0 %v1470
          %1826 = vmatprep.subr.bf16.mxu0 0
          %1827 = vmatpush1.bf16.msra.mxu0 %v1471
          %1828 = vmatprep.subr.bf16.mxu0 0
          %1829 = vmatpush1.bf16.msra.mxu0 %v1472
          %1830 = vmatprep.subr.bf16.mxu0 0
          %1831 = vmatpush1.bf16.msra.mxu0 %v1473
          %1832 = vmatprep.subr.bf16.mxu0 0
          %1833 = vmatpush1.bf16.msra.mxu0 %v1474
          %1834 = vmatprep.subr.bf16.mxu0 0
          %1835 = vmatpush1.bf16.msra.mxu0 %v1475
          %1836 = vmatprep.subr.bf16.mxu0 0
          %1837 = vmatpush1.bf16.msra.mxu0 %v1476
          %1838 = vmatprep.subr.bf16.mxu0 0
          %1839 = vmatpush1.bf16.msra.mxu0 %v1477
          %1840 = vmatprep.subr.bf16.mxu0 0
          %1841 = vmatpush1.bf16.msra.mxu0 %v1478
          %1842 = vmatprep.subr.bf16.mxu0 0
          %1843 = vmatpush1.bf16.msra.mxu0 %v1479
          %1844 = vmatprep.subr.bf16.mxu0 0
          %1845 = vmatpush1.bf16.msra.mxu0 %v1480
          %1846 = vmatprep.mubr.bf16.mxu0 %v700
          %1847 = vmatmul.mubr.bf16.gmra.mrb[0].mxu0 %v699
          %v1848 = vpop.f32.mrb[0].mxu0
          %v1849 = vadd.f32 %v1808, %v1848
          %v1850 = vpop.f32.mrb[0].mxu0
          %v1851 = vpop.f32.mrb[0].mxu0
          %v1852 = vadd.f32 %v1811, %v1851
          %v1853 = vpop.f32.mrb[0].mxu0
          %1854 = vdwg.mxu0
          %1855 = vmatprep.subr.bf16.mxu0 0
          %1856 = vmatpush1.bf16.msra.mxu0 %v1481
          %1857 = vmatprep.subr.bf16.mxu0 0
          %1858 = vmatpush1.bf16.msra.mxu0 %v1482
          %1859 = vmatprep.subr.bf16.mxu0 0
          %1860 = vmatpush1.bf16.msra.mxu0 %v1483
          %1861 = vmatprep.subr.bf16.mxu0 0
          %1862 = vmatpush1.bf16.msra.mxu0 %v1484
          %1863 = vmatprep.subr.bf16.mxu0 0
          %1864 = vmatpush1.bf16.msra.mxu0 %v1485
          %1865 = vmatprep.subr.bf16.mxu0 0
          %1866 = vmatpush1.bf16.msra.mxu0 %v1486
          %1867 = vmatprep.subr.bf16.mxu0 0
          %1868 = vmatpush1.bf16.msra.mxu0 %v1487
          %1869 = vmatprep.subr.bf16.mxu0 0
          %1870 = vmatpush1.bf16.msra.mxu0 %v1488
          %1871 = vmatprep.subr.bf16.mxu0 0
          %1872 = vmatpush1.bf16.msra.mxu0 %v1489
          %1873 = vmatprep.subr.bf16.mxu0 0
          %1874 = vmatpush1.bf16.msra.mxu0 %v1490
          %1875 = vmatprep.subr.bf16.mxu0 0
          %1876 = vmatpush1.bf16.msra.mxu0 %v1491
          %1877 = vmatprep.subr.bf16.mxu0 0
          %1878 = vmatpush1.bf16.msra.mxu0 %v1492
          %1879 = vmatprep.subr.bf16.mxu0 0
          %1880 = vmatpush1.bf16.msra.mxu0 %v1493
          %1881 = vmatprep.subr.bf16.mxu0 0
          %1882 = vmatpush1.bf16.msra.mxu0 %v1494
          %1883 = vmatprep.subr.bf16.mxu0 0
          %1884 = vmatpush1.bf16.msra.mxu0 %v1495
          %1885 = vmatprep.subr.bf16.mxu0 0
          %1886 = vmatpush1.bf16.msra.mxu0 %v1496
          %1887 = vmatprep.mubr.bf16.mxu0 %v702
          %1888 = vmatmul.mubr.bf16.gmra.mrb[0].mxu0 %v701
          %v1889 = vpop.f32.mrb[0].mxu0
          %v1890 = vadd.f32 %v1849, %v1889
          %v1891 = vpop.f32.mrb[0].mxu0
          %v1892 = vpop.f32.mrb[0].mxu0
          %v1893 = vadd.f32 %v1852, %v1892
          %v1894 = vpop.f32.mrb[0].mxu0
          %1895 = vdwg.mxu0
          %v1896 = vsub.f32 0.0, %v1890
          %v1897 = vsub.f32 0.0, %v1893
          %v1898 = vmul.f32 %v1896, 1.442695
          %v1899 = vpow.pop %v1898
          %v1900 = vmul.f32 %v1897, 1.442695
          %v1901 = vpow.pop %v1900
          %v1902 = vadd.f32 %v1899, 1.0
          %v1903 = vadd.f32 %v1901, 1.0
          %v1904 = vrcp.pop %v1902
          %v1905 = vrcp.pop %v1903
          %1906 = vst.msk [vmem:[%s190] sm:$0xff] %vm243, %v1904
          %1907 = vst.msk [vmem:[%s190 + $0x8] sm:$0xff] %vm243, %v1905
        $region40: #{tpu_custom_call.1} parent=31 // pred_fallthru
          _
        %s1908 = sand.u32 %s109, 1
        %s1909 = scalar_lea.sflag [#allocation8], %s1908
        %s1910 = sand.u32 %s109, 1
        %s1911 = smul.addr %s1910, 16
        %s1912 = scalar_lea.vmem [#allocation7], %s1911
        // Predicated region
        $region41: #{tpu_custom_call.1} parent=31 // pred_check
          %p1913 = pneg %p119
        $region42: #{tpu_custom_call.1} parent=31 // pred_check_branch
          %1915 = sbr.rel (%p1913) target = $region44
        $region43: #{tpu_custom_call.1} parent=31 // pred_region
          %s1917 = ssub.s32 256, 256
          %1918 = vsyncadd %s1909, %s1917
          %s1919 = smul.addr %s23, 2
          %s1920 = smul.addr %s1919, 128
          %s1921 = scalar_lea.hbm %s3, %s1920
          %s1922 = sshll.u32 %s1912, 4
          %s1923 = int_to_ptr.vmem [resolvable:$true] %s1922
          %1928 = dma.vmem_to_hbm [thread:$0]  %s1923, 256, %s1921, %s1909, 128, 128, 8
        $region44: #{tpu_custom_call.1} parent=31 // pred_fallthru
          _
      $region32: #{tpu_custom_call.1} parent=5 // pred_fallthru
        _
      %p1929 = scmp.le.s32.totalorder 2, %s14
      // Predicated region
      $region45: #{tpu_custom_call.1} parent=5 // pred_check
        %p1930 = pneg %p1929
      $region46: #{tpu_custom_call.1} parent=5 // pred_check_branch
        %1932 = sbr.rel (%p1930) target = $region48
      $region47: #{tpu_custom_call.1} parent=5 // pred_region
        %s1933 = ssub.s32 %s14, 2
        // Predicated region
        $region49: #{tpu_custom_call.1} parent=47 // pred_check
          %p1934 = pneg %p125
        $region50: #{tpu_custom_call.1} parent=47 // pred_check_branch
          %1936 = sbr.rel (%p1934) target = $region52
        $region51: #{tpu_custom_call.1} parent=47 // pred_region
          %s1937 = sand.u32 %s110, 1
          %s1938 = scalar_lea.sflag [#allocation8], %s1937
          %s1939 = sand.u32 %s110, 1
          %s1940 = smul.addr %s1939, 16
          %s1941 = scalar_lea.vmem [#allocation7], %s1940
          %1942 = dma.done %s1938, 256
        $region52: #{tpu_custom_call.1} parent=47 // pred_fallthru
          _
      $region48: #{tpu_custom_call.1} parent=5 // pred_fallthru
        _
    $region6: #{tpu_custom_call.1} parent=1 // loop_footer
      %s18 = sadd.s32 1, %s14
    $region7: #{tpu_custom_call.1} parent=1 // loop_footer_branch
      %13 = sbr.rel target = $region3
    $region8: #{tpu_custom_call.1} parent=1 // loop_exit
      _
    %1943 = vsyncpa [#allocation8], 1
    %s1944 = scalar_lea.sflag [#allocation8], 1
    %1945 = vsyncpa %s1944, 1

</llo_original>
